<compile_context>
chip_gen: v7x
topology: tpu7x:2x2x1
jax: 0.10.0
libtpu: 0.0.40
codegen_flags: <defaults>
</compile_context>

<pallas_src>
import functools

import jax
import jax.numpy as jnp
from jax.experimental import pallas as pl
from jax.experimental.pallas import tpu as pltpu

SEGMENT_SIZE = 256          # stand-in for args.segment_size (lane-aligned)
BATCH = 256                 # example batch: 2 full 128-row MXU tiles
TILE_B = 128                # batch tile = full MXU height (v5e 128; half of v6e/v7x 256)

# (in, out) for each Linear of the original module, and whether ReLU follows.
LAYER_DIMS = [
    (SEGMENT_SIZE, 128), (128, 64), (64, 12), (12, 3),      # encoder
    (3, 12), (12, 64), (64, 128), (128, SEGMENT_SIZE),      # decoder
]
RELU_AFTER = [True, True, True, False,                      # encoder
              True, True, True, False]                      # decoder


def _pad_dim(d):
    """Round a feature dim up to a multiple of 128 lanes."""
    return d if d % 128 == 0 else ((d + 127) // 128) * 128


def autoencoder_kernel(*refs):
    """refs = (x_ref, w1, b1, w2, b2, ..., w8, b8, out_ref).

    Weights are bf16 (padded, lane-aligned); biases and x/out are f32.
    """
    x_ref = refs[0]
    out_ref = refs[-1]
    param_refs = refs[1:-1]

    h = x_ref[...]                                         # (TILE_B, seg) f32
    for layer, relu in enumerate(RELU_AFTER):
        w_ref = param_refs[2 * layer]                      # (pad_in, pad_out) bf16
        b_ref = param_refs[2 * layer + 1]                  # (1, pad_out) f32
        # bf16 MXU matmul, f32 accumulation; bias/ReLU stay in f32 on the VPU.
        h = jnp.dot(h.astype(jnp.bfloat16), w_ref[...],
                    preferred_element_type=jnp.float32)
        h = h + b_ref[...]
        if relu:
            h = jnp.maximum(h, 0.0)
    out_ref[...] = h.astype(out_ref.dtype)


def init_params(key):
    """Deterministic init matching PyTorch Linear shapes (stored as (in, out))."""
    params = []
    for (fan_in, fan_out) in LAYER_DIMS:
        key, kw, kb = jax.random.split(key, 3)
        bound = 1.0 / (fan_in ** 0.5)
        w = jax.random.uniform(kw, (fan_in, fan_out), jnp.float32, -bound, bound)
        b = jax.random.uniform(kb, (1, fan_out), jnp.float32, -bound, bound)
        params += [w, b]
    return params


def pad_params_for_kernel(params):
    """Zero-pad sub-128 feature dims to 128 and cast weights to bf16.

    Padded weight rows/cols and bias entries are zero, so padded lanes carry
    exact zeros through every matmul / bias / ReLU -> identical final output.
    """
    padded = []
    for w, b in zip(params[0::2], params[1::2]):
        fi, fo = w.shape
        pfi, pfo = _pad_dim(fi), _pad_dim(fo)
        wp = jnp.zeros((pfi, pfo), jnp.bfloat16).at[:fi, :fo].set(
            w.astype(jnp.bfloat16))
        bp = jnp.zeros((1, pfo), jnp.float32).at[:, :fo].set(b)
        padded += [wp, bp]
    return padded


@functools.partial(jax.jit, static_argnames=("tile_b",))
def linear_autoencoder(x, padded_params, *, tile_b=TILE_B):
    B, S = x.shape
    assert S == SEGMENT_SIZE and B % tile_b == 0

    # x / out tiled over batch; weights & biases are grid-invariant blocks.
    x_spec = pl.BlockSpec((tile_b, S), lambda i: (i, 0))
    out_spec = pl.BlockSpec((tile_b, S), lambda i: (i, 0))
    param_specs = [
        pl.BlockSpec(p.shape, lambda i, nd=p.ndim: (0,) * nd)  # bind ndim early
        for p in padded_params
    ]

    # Advisory cost estimate for XLA's scheduler.
    flops = 2 * B * sum(int(w.shape[0]) * int(w.shape[1])
                        for w in padded_params[0::2])
    bytes_accessed = (2 * B * S * 4 +                       # x in + out (f32)
                      sum(int(p.size) * p.dtype.itemsize for p in padded_params))
    cost = pl.CostEstimate(flops=flops, transcendentals=0,
                           bytes_accessed=bytes_accessed)

    return pl.pallas_call(
        autoencoder_kernel,
        out_shape=jax.ShapeDtypeStruct((B, S), jnp.float32),
        grid_spec=pltpu.PrefetchScalarGridSpec(
            num_scalar_prefetch=0,
            grid=(B // tile_b,),
            in_specs=[x_spec] + param_specs,
            out_specs=out_spec,
        ),
        compiler_params=pltpu.CompilerParams(
            dimension_semantics=("parallel",)),   # batch tiles split across TCs
        cost_estimate=cost,
    )(x, *padded_params)


def reference_forward(x, params):
    """Pure-JAX reference mirroring the kernel's bf16-matmul / f32-accumulate path."""
    h = x
    for layer, relu in enumerate(RELU_AFTER):
        w, b = params[2 * layer], params[2 * layer + 1]
        h = jnp.dot(h.astype(jnp.bfloat16), w.astype(jnp.bfloat16),
                    preferred_element_type=jnp.float32) + b
        if relu:
            h = jnp.maximum(h, 0.0)
    return h


if __name__ == "__main__":
    key = jax.random.PRNGKey(0)
    key, kx = jax.random.split(key)
    x = jax.random.normal(kx, (BATCH, SEGMENT_SIZE), jnp.float32)
    params = init_params(key)                # logical (unpadded, f32) params
    padded_params = pad_params_for_kernel(params)

    out = linear_autoencoder(x, padded_params)
    out = jax.block_until_ready(out)

    ref = reference_forward(x, params)
    assert out.shape == (BATCH, SEGMENT_SIZE)
    assert jnp.allclose(out, ref, atol=2e-3, rtol=2e-3), \
        float(jnp.max(jnp.abs(out - ref)))

    print("KERNEL_OK")
</pallas_src>

<mosaic_0001>
module attributes {stable_mosaic.version = 11 : i64} {
  func.func @autoencoder_kernel(%arg0: i32, %arg1: memref<128x256xf32, #tpu.memory_space<vmem>>, %arg2: memref<256x128xbf16, #tpu.memory_space<vmem>>, %arg3: memref<1x128xf32, #tpu.memory_space<vmem>>, %arg4: memref<128x128xbf16, #tpu.memory_space<vmem>>, %arg5: memref<1x128xf32, #tpu.memory_space<vmem>>, %arg6: memref<128x128xbf16, #tpu.memory_space<vmem>>, %arg7: memref<1x128xf32, #tpu.memory_space<vmem>>, %arg8: memref<128x128xbf16, #tpu.memory_space<vmem>>, %arg9: memref<1x128xf32, #tpu.memory_space<vmem>>, %arg10: memref<128x128xbf16, #tpu.memory_space<vmem>>, %arg11: memref<1x128xf32, #tpu.memory_space<vmem>>, %arg12: memref<128x128xbf16, #tpu.memory_space<vmem>>, %arg13: memref<1x128xf32, #tpu.memory_space<vmem>>, %arg14: memref<128x128xbf16, #tpu.memory_space<vmem>>, %arg15: memref<1x128xf32, #tpu.memory_space<vmem>>, %arg16: memref<128x256xbf16, #tpu.memory_space<vmem>>, %arg17: memref<1x256xf32, #tpu.memory_space<vmem>>, %arg18: memref<128x256xf32, #tpu.memory_space<vmem>>) attributes {dimension_semantics = [#tpu.dimension_semantics<parallel>], iteration_bounds = array<i64: 2>, scalar_prefetch = 0 : i64, scratch_operands = 0 : i64, tpu.core_type = #tpu.core_type<tc>, window_params = [{transform_indices = @transform_0, window_bounds = array<i64: 128, 256>}, {pipeline_mode = #tpu.pipeline_mode<synchronous>, transform_indices = @transform_1, window_bounds = array<i64: 256, 128>}, {pipeline_mode = #tpu.pipeline_mode<synchronous>, transform_indices = @transform_2, window_bounds = array<i64: 1, 128>}, {pipeline_mode = #tpu.pipeline_mode<synchronous>, transform_indices = @transform_3, window_bounds = array<i64: 128, 128>}, {pipeline_mode = #tpu.pipeline_mode<synchronous>, transform_indices = @transform_4, window_bounds = array<i64: 1, 128>}, {pipeline_mode = #tpu.pipeline_mode<synchronous>, transform_indices = @transform_5, window_bounds = array<i64: 128, 128>}, {pipeline_mode = #tpu.pipeline_mode<synchronous>, transform_indices = @transform_6, window_bounds = array<i64: 1, 128>}, {pipeline_mode = #tpu.pipeline_mode<synchronous>, transform_indices = @transform_7, window_bounds = array<i64: 128, 128>}, {pipeline_mode = #tpu.pipeline_mode<synchronous>, transform_indices = @transform_8, window_bounds = array<i64: 1, 128>}, {pipeline_mode = #tpu.pipeline_mode<synchronous>, transform_indices = @transform_9, window_bounds = array<i64: 128, 128>}, {pipeline_mode = #tpu.pipeline_mode<synchronous>, transform_indices = @transform_10, window_bounds = array<i64: 1, 128>}, {pipeline_mode = #tpu.pipeline_mode<synchronous>, transform_indices = @transform_11, window_bounds = array<i64: 128, 128>}, {pipeline_mode = #tpu.pipeline_mode<synchronous>, transform_indices = @transform_12, window_bounds = array<i64: 1, 128>}, {pipeline_mode = #tpu.pipeline_mode<synchronous>, transform_indices = @transform_13, window_bounds = array<i64: 128, 128>}, {pipeline_mode = #tpu.pipeline_mode<synchronous>, transform_indices = @transform_14, window_bounds = array<i64: 1, 128>}, {pipeline_mode = #tpu.pipeline_mode<synchronous>, transform_indices = @transform_15, window_bounds = array<i64: 128, 256>}, {pipeline_mode = #tpu.pipeline_mode<synchronous>, transform_indices = @transform_16, window_bounds = array<i64: 1, 256>}, {transform_indices = @transform_17, window_bounds = array<i64: 128, 256>}]} {
    %c0 = arith.constant 0 : index
    %c0_0 = arith.constant 0 : index
    %0 = vector.load %arg1[%c0, %c0_0] : memref<128x256xf32, #tpu.memory_space<vmem>>, vector<128x256xf32>
    %1 = arith.truncf %0 : vector<128x256xf32> to vector<128x256xbf16>
    %c0_1 = arith.constant 0 : index
    %c0_2 = arith.constant 0 : index
    %2 = vector.load %arg2[%c0_1, %c0_2] : memref<256x128xbf16, #tpu.memory_space<vmem>>, vector<256x128xbf16>
    %cst = arith.constant dense<0.000000e+00> : vector<128x128xf32>
    %3 = tpu.matmul %1, %2, %cst {dimension_numbers = #tpu.dot_dimension_numbers<[1], [0], [0], [1], [0, 0, 1, 1], [], []>} : vector<128x256xbf16>, vector<256x128xbf16>, vector<128x128xf32> -> vector<128x128xf32>
    %c0_3 = arith.constant 0 : index
    %c0_4 = arith.constant 0 : index
    %4 = vector.load %arg3[%c0_3, %c0_4] : memref<1x128xf32, #tpu.memory_space<vmem>>, vector<1x128xf32>
    %5 = vector.broadcast %4 : vector<1x128xf32> to vector<128x128xf32>
    %6 = arith.addf %3, %5 : vector<128x128xf32>
    %cst_5 = arith.constant 0.000000e+00 : f32
    %7 = vector.broadcast %cst_5 : f32 to vector<128x128xf32>
    %8 = arith.maximumf %6, %7 : vector<128x128xf32>
    %9 = arith.truncf %8 : vector<128x128xf32> to vector<128x128xbf16>
    %c0_6 = arith.constant 0 : index
    %c0_7 = arith.constant 0 : index
    %10 = vector.load %arg4[%c0_6, %c0_7] : memref<128x128xbf16, #tpu.memory_space<vmem>>, vector<128x128xbf16>
    %cst_8 = arith.constant dense<0.000000e+00> : vector<128x128xf32>
    %11 = tpu.matmul %9, %10, %cst_8 {dimension_numbers = #tpu.dot_dimension_numbers<[1], [0], [0], [1], [0, 0, 1, 1], [], []>} : vector<128x128xbf16>, vector<128x128xbf16>, vector<128x128xf32> -> vector<128x128xf32>
    %c0_9 = arith.constant 0 : index
    %c0_10 = arith.constant 0 : index
    %12 = vector.load %arg5[%c0_9, %c0_10] : memref<1x128xf32, #tpu.memory_space<vmem>>, vector<1x128xf32>
    %13 = vector.broadcast %12 : vector<1x128xf32> to vector<128x128xf32>
    %14 = arith.addf %11, %13 : vector<128x128xf32>
    %cst_11 = arith.constant 0.000000e+00 : f32
    %15 = vector.broadcast %cst_11 : f32 to vector<128x128xf32>
    %16 = arith.maximumf %14, %15 : vector<128x128xf32>
    %17 = arith.truncf %16 : vector<128x128xf32> to vector<128x128xbf16>
    %c0_12 = arith.constant 0 : index
    %c0_13 = arith.constant 0 : index
    %18 = vector.load %arg6[%c0_12, %c0_13] : memref<128x128xbf16, #tpu.memory_space<vmem>>, vector<128x128xbf16>
    %cst_14 = arith.constant dense<0.000000e+00> : vector<128x128xf32>
    %19 = tpu.matmul %17, %18, %cst_14 {dimension_numbers = #tpu.dot_dimension_numbers<[1], [0], [0], [1], [0, 0, 1, 1], [], []>} : vector<128x128xbf16>, vector<128x128xbf16>, vector<128x128xf32> -> vector<128x128xf32>
    %c0_15 = arith.constant 0 : index
    %c0_16 = arith.constant 0 : index
    %20 = vector.load %arg7[%c0_15, %c0_16] : memref<1x128xf32, #tpu.memory_space<vmem>>, vector<1x128xf32>
    %21 = vector.broadcast %20 : vector<1x128xf32> to vector<128x128xf32>
    %22 = arith.addf %19, %21 : vector<128x128xf32>
    %cst_17 = arith.constant 0.000000e+00 : f32
    %23 = vector.broadcast %cst_17 : f32 to vector<128x128xf32>
    %24 = arith.maximumf %22, %23 : vector<128x128xf32>
    %25 = arith.truncf %24 : vector<128x128xf32> to vector<128x128xbf16>
    %c0_18 = arith.constant 0 : index
    %c0_19 = arith.constant 0 : index
    %26 = vector.load %arg8[%c0_18, %c0_19] : memref<128x128xbf16, #tpu.memory_space<vmem>>, vector<128x128xbf16>
    %cst_20 = arith.constant dense<0.000000e+00> : vector<128x128xf32>
    %27 = tpu.matmul %25, %26, %cst_20 {dimension_numbers = #tpu.dot_dimension_numbers<[1], [0], [0], [1], [0, 0, 1, 1], [], []>} : vector<128x128xbf16>, vector<128x128xbf16>, vector<128x128xf32> -> vector<128x128xf32>
    %c0_21 = arith.constant 0 : index
    %c0_22 = arith.constant 0 : index
    %28 = vector.load %arg9[%c0_21, %c0_22] : memref<1x128xf32, #tpu.memory_space<vmem>>, vector<1x128xf32>
    %29 = vector.broadcast %28 : vector<1x128xf32> to vector<128x128xf32>
    %30 = arith.addf %27, %29 : vector<128x128xf32>
    %31 = arith.truncf %30 : vector<128x128xf32> to vector<128x128xbf16>
    %c0_23 = arith.constant 0 : index
    %c0_24 = arith.constant 0 : index
    %32 = vector.load %arg10[%c0_23, %c0_24] : memref<128x128xbf16, #tpu.memory_space<vmem>>, vector<128x128xbf16>
    %cst_25 = arith.constant dense<0.000000e+00> : vector<128x128xf32>
    %33 = tpu.matmul %31, %32, %cst_25 {dimension_numbers = #tpu.dot_dimension_numbers<[1], [0], [0], [1], [0, 0, 1, 1], [], []>} : vector<128x128xbf16>, vector<128x128xbf16>, vector<128x128xf32> -> vector<128x128xf32>
    %c0_26 = arith.constant 0 : index
    %c0_27 = arith.constant 0 : index
    %34 = vector.load %arg11[%c0_26, %c0_27] : memref<1x128xf32, #tpu.memory_space<vmem>>, vector<1x128xf32>
    %35 = vector.broadcast %34 : vector<1x128xf32> to vector<128x128xf32>
    %36 = arith.addf %33, %35 : vector<128x128xf32>
    %cst_28 = arith.constant 0.000000e+00 : f32
    %37 = vector.broadcast %cst_28 : f32 to vector<128x128xf32>
    %38 = arith.maximumf %36, %37 : vector<128x128xf32>
    %39 = arith.truncf %38 : vector<128x128xf32> to vector<128x128xbf16>
    %c0_29 = arith.constant 0 : index
    %c0_30 = arith.constant 0 : index
    %40 = vector.load %arg12[%c0_29, %c0_30] : memref<128x128xbf16, #tpu.memory_space<vmem>>, vector<128x128xbf16>
    %cst_31 = arith.constant dense<0.000000e+00> : vector<128x128xf32>
    %41 = tpu.matmul %39, %40, %cst_31 {dimension_numbers = #tpu.dot_dimension_numbers<[1], [0], [0], [1], [0, 0, 1, 1], [], []>} : vector<128x128xbf16>, vector<128x128xbf16>, vector<128x128xf32> -> vector<128x128xf32>
    %c0_32 = arith.constant 0 : index
    %c0_33 = arith.constant 0 : index
    %42 = vector.load %arg13[%c0_32, %c0_33] : memref<1x128xf32, #tpu.memory_space<vmem>>, vector<1x128xf32>
    %43 = vector.broadcast %42 : vector<1x128xf32> to vector<128x128xf32>
    %44 = arith.addf %41, %43 : vector<128x128xf32>
    %cst_34 = arith.constant 0.000000e+00 : f32
    %45 = vector.broadcast %cst_34 : f32 to vector<128x128xf32>
    %46 = arith.maximumf %44, %45 : vector<128x128xf32>
    %47 = arith.truncf %46 : vector<128x128xf32> to vector<128x128xbf16>
    %c0_35 = arith.constant 0 : index
    %c0_36 = arith.constant 0 : index
    %48 = vector.load %arg14[%c0_35, %c0_36] : memref<128x128xbf16, #tpu.memory_space<vmem>>, vector<128x128xbf16>
    %cst_37 = arith.constant dense<0.000000e+00> : vector<128x128xf32>
    %49 = tpu.matmul %47, %48, %cst_37 {dimension_numbers = #tpu.dot_dimension_numbers<[1], [0], [0], [1], [0, 0, 1, 1], [], []>} : vector<128x128xbf16>, vector<128x128xbf16>, vector<128x128xf32> -> vector<128x128xf32>
    %c0_38 = arith.constant 0 : index
    %c0_39 = arith.constant 0 : index
    %50 = vector.load %arg15[%c0_38, %c0_39] : memref<1x128xf32, #tpu.memory_space<vmem>>, vector<1x128xf32>
    %51 = vector.broadcast %50 : vector<1x128xf32> to vector<128x128xf32>
    %52 = arith.addf %49, %51 : vector<128x128xf32>
    %cst_40 = arith.constant 0.000000e+00 : f32
    %53 = vector.broadcast %cst_40 : f32 to vector<128x128xf32>
    %54 = arith.maximumf %52, %53 : vector<128x128xf32>
    %55 = arith.truncf %54 : vector<128x128xf32> to vector<128x128xbf16>
    %c0_41 = arith.constant 0 : index
    %c0_42 = arith.constant 0 : index
    %56 = vector.load %arg16[%c0_41, %c0_42] : memref<128x256xbf16, #tpu.memory_space<vmem>>, vector<128x256xbf16>
    %cst_43 = arith.constant dense<0.000000e+00> : vector<128x256xf32>
    %57 = tpu.matmul %55, %56, %cst_43 {dimension_numbers = #tpu.dot_dimension_numbers<[1], [0], [0], [1], [0, 0, 1, 1], [], []>} : vector<128x128xbf16>, vector<128x256xbf16>, vector<128x256xf32> -> vector<128x256xf32>
    %c0_44 = arith.constant 0 : index
    %c0_45 = arith.constant 0 : index
    %58 = vector.load %arg17[%c0_44, %c0_45] : memref<1x256xf32, #tpu.memory_space<vmem>>, vector<1x256xf32>
    %59 = vector.broadcast %58 : vector<1x256xf32> to vector<128x256xf32>
    %60 = arith.addf %57, %59 : vector<128x256xf32>
    %c0_46 = arith.constant 0 : index
    %c0_47 = arith.constant 0 : index
    %61 = vector.load %arg18[%c0_46, %c0_47] : memref<128x256xf32, #tpu.memory_space<vmem>>, vector<128x256xf32>
    tpu.vector_store %arg18[%c0_46, %c0_47], %60 {strides = array<i32>} : memref<128x256xf32, #tpu.memory_space<vmem>>, vector<128x256xf32>,
    return
  }
  func.func @transform_0(%arg0: i32) -> (i32, i32) {
    %c0_i32 = arith.constant 0 : i32
    %c0_i32_0 = arith.constant 0 : i32
    return %arg0, %c0_i32 : i32, i32
  }
  func.func @transform_1(%arg0: i32) -> (i32, i32) {
    %c0_i32 = arith.constant 0 : i32
    %c0_i32_0 = arith.constant 0 : i32
    %c0_i32_1 = arith.constant 0 : i32
    return %c0_i32, %c0_i32_0 : i32, i32
  }
  func.func @transform_2(%arg0: i32) -> (i32, i32) {
    %c0_i32 = arith.constant 0 : i32
    %c0_i32_0 = arith.constant 0 : i32
    %c0_i32_1 = arith.constant 0 : i32
    return %c0_i32, %c0_i32_0 : i32, i32
  }
  func.func @transform_3(%arg0: i32) -> (i32, i32) {
    %c0_i32 = arith.constant 0 : i32
    %c0_i32_0 = arith.constant 0 : i32
    %c0_i32_1 = arith.constant 0 : i32
    return %c0_i32, %c0_i32_0 : i32, i32
  }
  func.func @transform_4(%arg0: i32) -> (i32, i32) {
    %c0_i32 = arith.constant 0 : i32
    %c0_i32_0 = arith.constant 0 : i32
    %c0_i32_1 = arith.constant 0 : i32
    return %c0_i32, %c0_i32_0 : i32, i32
  }
  func.func @transform_5(%arg0: i32) -> (i32, i32) {
    %c0_i32 = arith.constant 0 : i32
    %c0_i32_0 = arith.constant 0 : i32
    %c0_i32_1 = arith.constant 0 : i32
    return %c0_i32, %c0_i32_0 : i32, i32
  }
  func.func @transform_6(%arg0: i32) -> (i32, i32) {
    %c0_i32 = arith.constant 0 : i32
    %c0_i32_0 = arith.constant 0 : i32
    %c0_i32_1 = arith.constant 0 : i32
    return %c0_i32, %c0_i32_0 : i32, i32
  }
  func.func @transform_7(%arg0: i32) -> (i32, i32) {
    %c0_i32 = arith.constant 0 : i32
    %c0_i32_0 = arith.constant 0 : i32
    %c0_i32_1 = arith.constant 0 : i32
    return %c0_i32, %c0_i32_0 : i32, i32
  }
  func.func @transform_8(%arg0: i32) -> (i32, i32) {
    %c0_i32 = arith.constant 0 : i32
    %c0_i32_0 = arith.constant 0 : i32
    %c0_i32_1 = arith.constant 0 : i32
    return %c0_i32, %c0_i32_0 : i32, i32
  }
  func.func @transform_9(%arg0: i32) -> (i32, i32) {
    %c0_i32 = arith.constant 0 : i32
    %c0_i32_0 = arith.constant 0 : i32
    %c0_i32_1 = arith.constant 0 : i32
    return %c0_i32, %c0_i32_0 : i32, i32
  }
  func.func @transform_10(%arg0: i32) -> (i32, i32) {
    %c0_i32 = arith.constant 0 : i32
    %c0_i32_0 = arith.constant 0 : i32
    %c0_i32_1 = arith.constant 0 : i32
    return %c0_i32, %c0_i32_0 : i32, i32
  }
  func.func @transform_11(%arg0: i32) -> (i32, i32) {
    %c0_i32 = arith.constant 0 : i32
    %c0_i32_0 = arith.constant 0 : i32
    %c0_i32_1 = arith.constant 0 : i32
    return %c0_i32, %c0_i32_0 : i32, i32
  }
  func.func @transform_12(%arg0: i32) -> (i32, i32) {
    %c0_i32 = arith.constant 0 : i32
    %c0_i32_0 = arith.constant 0 : i32
    %c0_i32_1 = arith.constant 0 : i32
    return %c0_i32, %c0_i32_0 : i32, i32
  }
  func.func @transform_13(%arg0: i32) -> (i32, i32) {
    %c0_i32 = arith.constant 0 : i32
    %c0_i32_0 = arith.constant 0 : i32
    %c0_i32_1 = arith.constant 0 : i32
    return %c0_i32, %c0_i32_0 : i32, i32
  }
  func.func @transform_14(%arg0: i32) -> (i32, i32) {
    %c0_i32 = arith.constant 0 : i32
    %c0_i32_0 = arith.constant 0 : i32
    %c0_i32_1 = arith.constant 0 : i32
    return %c0_i32, %c0_i32_0 : i32, i32
  }
  func.func @transform_15(%arg0: i32) -> (i32, i32) {
    %c0_i32 = arith.constant 0 : i32
    %c0_i32_0 = arith.constant 0 : i32
    %c0_i32_1 = arith.constant 0 : i32
    return %c0_i32, %c0_i32_0 : i32, i32
  }
  func.func @transform_16(%arg0: i32) -> (i32, i32) {
    %c0_i32 = arith.constant 0 : i32
    %c0_i32_0 = arith.constant 0 : i32
    %c0_i32_1 = arith.constant 0 : i32
    return %c0_i32, %c0_i32_0 : i32, i32
  }
  func.func @transform_17(%arg0: i32) -> (i32, i32) {
    %c0_i32 = arith.constant 0 : i32
    %c0_i32_0 = arith.constant 0 : i32
    return %arg0, %c0_i32 : i32, i32
  }
}

</mosaic_0001>

<llo_original>
// kernel: linear_autoencoder.1
$region0: #{linear_autoencoder.1}
  #allocation0 [shape = 'u32[]', space=smem, size = 0x4, offset = 0x4, fixed_abs, tag = 'smem constant byte address 0x4 - core index']
  #allocation1 [shape = 'u32[144,128]{1,0:T(1,128)}', space=vmem, size = 0x12000, scoped, tag = 'internal scratch']
  %s0 = inlined_call_operand.hbm [shape: f32[256,256], index: 0, kind: input, shape index: {}]
  %s1 = inlined_call_operand.hbm [shape: bf16[256,128], index: 1, kind: input, shape index: {}]
  %s2 = inlined_call_operand.vmem [shape: f32[1,128], index: 2, kind: input, shape index: {}]
  %s3 = inlined_call_operand.hbm [shape: bf16[128,128], index: 3, kind: input, shape index: {}]
  %s4 = inlined_call_operand.vmem [shape: f32[1,128], index: 4, kind: input, shape index: {}]
  %s5 = inlined_call_operand.hbm [shape: bf16[128,128], index: 5, kind: input, shape index: {}]
  %s6 = inlined_call_operand.vmem [shape: f32[1,128], index: 6, kind: input, shape index: {}]
  %s7 = inlined_call_operand.hbm [shape: bf16[128,128], index: 7, kind: input, shape index: {}]
  %s8 = inlined_call_operand.vmem [shape: f32[1,128], index: 8, kind: input, shape index: {}]
  %s9 = inlined_call_operand.hbm [shape: bf16[128,128], index: 9, kind: input, shape index: {}]
  %s10 = inlined_call_operand.vmem [shape: f32[1,128], index: 10, kind: input, shape index: {}]
  %s11 = inlined_call_operand.hbm [shape: bf16[128,128], index: 11, kind: input, shape index: {}]
  %s12 = inlined_call_operand.vmem [shape: f32[1,128], index: 12, kind: input, shape index: {}]
  %s13 = inlined_call_operand.hbm [shape: bf16[128,128], index: 13, kind: input, shape index: {}]
  %s14 = inlined_call_operand.vmem [shape: f32[1,128], index: 14, kind: input, shape index: {}]
  %s15 = inlined_call_operand.hbm [shape: bf16[128,256], index: 15, kind: input, shape index: {}]
  %s16 = inlined_call_operand.vmem [shape: f32[1,256], index: 16, kind: input, shape index: {}]
  %s17 = inlined_call_operand.hbm [shape: f32[256,256], index: 17, kind: output, shape index: {}]
  %s18 = sld [smem:[#allocation0]]
  $region137: #{linear_autoencoder.1} parent=0
    _
  %s20 = ssub.s32 1, %s18
  %s21 = scalar_select 0, %s20, %s18
  $region1: #{linear_autoencoder.1} parent=0
    #allocation2 [shape = 'u8[262144]{0}', space=vmem, size = 0x40000, scoped, tag = 'input window, operand 0']
    #allocation3 [shape = 's32[2]{0}', space=sflag, size = 0x8, scoped, tag = 'scoped memory for linear_autoencoder.1']
    #allocation4 [shape = 's32[2]{0}', space=sflag, size = 0x8, scoped, tag = 'scoped memory for linear_autoencoder.1']
    #allocation5 [shape = 'u8[65536]{0}', space=vmem, size = 0x10000, scoped, tag = 'input window, operand 1, single buffered']
    #allocation6 [shape = 's32[1]{0}', space=sflag, size = 0x4, scoped, tag = 'scoped memory for linear_autoencoder.1']
    #allocation7 [shape = 'u8[32768]{0}', space=vmem, size = 0x8000, scoped, tag = 'input window, operand 3, single buffered']
    #allocation8 [shape = 'u8[32768]{0}', space=vmem, size = 0x8000, scoped, tag = 'input window, operand 5, single buffered']
    #allocation9 [shape = 's32[1]{0}', space=sflag, size = 0x4, scoped, tag = 'scoped memory for linear_autoencoder.1']
    #allocation10 [shape = 'u8[32768]{0}', space=vmem, size = 0x8000, scoped, tag = 'input window, operand 7, single buffered']
    #allocation11 [shape = 'u8[32768]{0}', space=vmem, size = 0x8000, scoped, tag = 'input window, operand 9, single buffered']
    #allocation12 [shape = 's32[1]{0}', space=sflag, size = 0x4, scoped, tag = 'scoped memory for linear_autoencoder.1']
    #allocation13 [shape = 'u8[32768]{0}', space=vmem, size = 0x8000, scoped, tag = 'input window, operand 11, single buffered']
    #allocation14 [shape = 'u8[32768]{0}', space=vmem, size = 0x8000, scoped, tag = 'input window, operand 13, single buffered']
    #allocation15 [shape = 's32[1]{0}', space=sflag, size = 0x4, scoped, tag = 'scoped memory for linear_autoencoder.1']
    #allocation16 [shape = 'u8[65536]{0}', space=vmem, size = 0x10000, scoped, tag = 'input window, operand 15, single buffered']
    #allocation17 [shape = 'u8[262144]{0}', space=vmem, size = 0x40000, scoped, tag = 'output window, operand 0']
    %22 = vsyncpa [#allocation3], 0
    %s23 = scalar_lea.sflag [#allocation3], 1
    %24 = vsyncpa %s23, 0
    %25 = vsyncpa [#allocation6], 0
    %26 = vsyncpa [#allocation9], 0
    %27 = vsyncpa [#allocation12], 0
    %28 = vsyncpa [#allocation15], 0
    %29 = vsyncpa [#allocation4], 0
    %s30 = scalar_lea.sflag [#allocation4], 1
    %31 = vsyncpa %s30, 0
    loop: start=0, step=1, limit=4
    $region2: #{linear_autoencoder.1} parent=1 // loop_pre_header
      _
    $region3: #{linear_autoencoder.1} parent=1 // loop_header
      %s33 = sphi 0, %s37
      %p34 = scmp.ge.s32.totalorder %s33, 4
      %s43 = sphi 0, %s45
      %s46 = sphi 0, %s43
      %s47 = sphi 0, %s46
      %s63 = sphi 0, %s47
      %s67 = sphi 0, %s67
      %s69 = sphi 0, %s67
      %s70 = sphi 0, %s69
      %s84 = sphi 0, %s70
      %s88 = sphi 0, %s88
      %s90 = sphi 0, %s88
      %s91 = sphi 0, %s90
      %s105 = sphi 0, %s91
      %s109 = sphi 0, %s109
      %s111 = sphi 0, %s109
      %s112 = sphi 0, %s111
      %s126 = sphi 0, %s112
      %s130 = sphi 0, %s130
      %s132 = sphi 0, %s130
      %s133 = sphi 0, %s132
      %s147 = sphi 0, %s133
      %s151 = sphi 0, %s151
      %s153 = sphi 0, %s151
      %s154 = sphi 0, %s153
      %s168 = sphi 0, %s154
      %s172 = sphi 0, %s172
      %s174 = sphi 0, %s172
      %s175 = sphi 0, %s174
      %s189 = sphi 0, %s175
      %s193 = sphi 0, %s193
      %s195 = sphi 0, %s193
      %s196 = sphi 0, %s195
      %s210 = sphi 0, %s196
      %s214 = sphi 0, %s214
      %s216 = sphi 0, %s214
      %s217 = sphi 0, %s216
      %s231 = sphi 0, %s217
      %s235 = sphi 0, %s235
      %s237 = sphi 0, %s235
      %s238 = sphi 0, %s237
      %s252 = sphi 0, %s238
      %s256 = sphi 0, %s256
      %s258 = sphi 0, %s256
      %s259 = sphi 0, %s258
      %s273 = sphi 0, %s259
      %s277 = sphi 0, %s277
      %s279 = sphi 0, %s277
      %s280 = sphi 0, %s279
      %s294 = sphi 0, %s280
      %s298 = sphi 0, %s298
      %s300 = sphi 0, %s298
      %s301 = sphi 0, %s300
      %s315 = sphi 0, %s301
      %s319 = sphi 0, %s319
      %s321 = sphi 0, %s319
      %s322 = sphi 0, %s321
      %s336 = sphi 0, %s322
      %s340 = sphi 0, %s340
      %s342 = sphi 0, %s340
      %s343 = sphi 0, %s342
      %s357 = sphi 0, %s343
      %s361 = sphi 0, %s361
      %s363 = sphi 0, %s361
      %s364 = sphi 0, %s363
      %s378 = sphi 0, %s364
      %s382 = sphi 0, %s382
      %s384 = sphi 0, %s382
      %s385 = sphi 0, %s384
      %s399 = sphi 0, %s385
      %s405 = sphi 0, %s407
      %s408 = sphi 0, %s405
      %s409 = sphi 0, %s408
      %s425 = sphi 0, %s409
    $region4: #{linear_autoencoder.1} parent=1 // loop_header_branch
      %36 = sbr.rel (%p34) target = $region8
    $region5: #{linear_autoencoder.1} parent=1 // loop_body
      %s38 = ssub.s32 %s33, 1
      %s39 = ssub.s32 %s33, 2
      %s40 = sadd.s32 %s33, 1
      %s41 = ssub.s32 %s33, %s40
      %p42 = scmp.eq.s32.totalorder %s41, 0
      %s44 = sadd.s32 %s43, 1
      %s45 = scalar_select %p42, %s43, %s44
      %p48 = pneg %p42
      %p49 = scmp.eq.s32.totalorder %s33, 1
      %p50 = por %p48, %p49
      %p51 = scmp.ne.s32.totalorder %s43, %s46
      %p52 = scmp.eq.s32.totalorder %s33, 0
      %p53 = por %p51, %p52
      %p54 = scmp.ne.s32.totalorder %s43, %s46
      %p55 = scmp.eq.s32.totalorder %s38, 1
      %p56 = por %p54, %p55
      %p57 = scmp.ne.s32.totalorder %s46, %s47
      %p58 = scmp.eq.s32.totalorder %s38, 0
      %p59 = por %p57, %p58
      %p60 = scmp.ne.s32.totalorder %s46, %s47
      %p61 = scmp.eq.s32.totalorder %s39, 1
      %p62 = por %p60, %p61
      %p64 = scmp.ne.s32.totalorder %s47, %s63
      %p65 = scmp.eq.s32.totalorder %s39, 0
      %p66 = por %p64, %p65
      %s68 = sadd.s32 %s67, 1
      %p71 = scmp.eq.s32.totalorder %s33, 1
      %p72 = scmp.ne.s32.totalorder %s67, %s69
      %p73 = scmp.eq.s32.totalorder %s33, 0
      %p74 = por %p72, %p73
      %p75 = scmp.ne.s32.totalorder %s67, %s69
      %p76 = scmp.eq.s32.totalorder %s38, 1
      %p77 = por %p75, %p76
      %p78 = scmp.ne.s32.totalorder %s69, %s70
      %p79 = scmp.eq.s32.totalorder %s38, 0
      %p80 = por %p78, %p79
      %p81 = scmp.ne.s32.totalorder %s69, %s70
      %p82 = scmp.eq.s32.totalorder %s39, 1
      %p83 = por %p81, %p82
      %p85 = scmp.ne.s32.totalorder %s70, %s84
      %p86 = scmp.eq.s32.totalorder %s39, 0
      %p87 = por %p85, %p86
      %s89 = sadd.s32 %s88, 1
      %p92 = scmp.eq.s32.totalorder %s33, 1
      %p93 = scmp.ne.s32.totalorder %s88, %s90
      %p94 = scmp.eq.s32.totalorder %s33, 0
      %p95 = por %p93, %p94
      %p96 = scmp.ne.s32.totalorder %s88, %s90
      %p97 = scmp.eq.s32.totalorder %s38, 1
      %p98 = por %p96, %p97
      %p99 = scmp.ne.s32.totalorder %s90, %s91
      %p100 = scmp.eq.s32.totalorder %s38, 0
      %p101 = por %p99, %p100
      %p102 = scmp.ne.s32.totalorder %s90, %s91
      %p103 = scmp.eq.s32.totalorder %s39, 1
      %p104 = por %p102, %p103
      %p106 = scmp.ne.s32.totalorder %s91, %s105
      %p107 = scmp.eq.s32.totalorder %s39, 0
      %p108 = por %p106, %p107
      %s110 = sadd.s32 %s109, 1
      %p113 = scmp.eq.s32.totalorder %s33, 1
      %p114 = scmp.ne.s32.totalorder %s109, %s111
      %p115 = scmp.eq.s32.totalorder %s33, 0
      %p116 = por %p114, %p115
      %p117 = scmp.ne.s32.totalorder %s109, %s111
      %p118 = scmp.eq.s32.totalorder %s38, 1
      %p119 = por %p117, %p118
      %p120 = scmp.ne.s32.totalorder %s111, %s112
      %p121 = scmp.eq.s32.totalorder %s38, 0
      %p122 = por %p120, %p121
      %p123 = scmp.ne.s32.totalorder %s111, %s112
      %p124 = scmp.eq.s32.totalorder %s39, 1
      %p125 = por %p123, %p124
      %p127 = scmp.ne.s32.totalorder %s112, %s126
      %p128 = scmp.eq.s32.totalorder %s39, 0
      %p129 = por %p127, %p128
      %s131 = sadd.s32 %s130, 1
      %p134 = scmp.eq.s32.totalorder %s33, 1
      %p135 = scmp.ne.s32.totalorder %s130, %s132
      %p136 = scmp.eq.s32.totalorder %s33, 0
      %p137 = por %p135, %p136
      %p138 = scmp.ne.s32.totalorder %s130, %s132
      %p139 = scmp.eq.s32.totalorder %s38, 1
      %p140 = por %p138, %p139
      %p141 = scmp.ne.s32.totalorder %s132, %s133
      %p142 = scmp.eq.s32.totalorder %s38, 0
      %p143 = por %p141, %p142
      %p144 = scmp.ne.s32.totalorder %s132, %s133
      %p145 = scmp.eq.s32.totalorder %s39, 1
      %p146 = por %p144, %p145
      %p148 = scmp.ne.s32.totalorder %s133, %s147
      %p149 = scmp.eq.s32.totalorder %s39, 0
      %p150 = por %p148, %p149
      %s152 = sadd.s32 %s151, 1
      %p155 = scmp.eq.s32.totalorder %s33, 1
      %p156 = scmp.ne.s32.totalorder %s151, %s153
      %p157 = scmp.eq.s32.totalorder %s33, 0
      %p158 = por %p156, %p157
      %p159 = scmp.ne.s32.totalorder %s151, %s153
      %p160 = scmp.eq.s32.totalorder %s38, 1
      %p161 = por %p159, %p160
      %p162 = scmp.ne.s32.totalorder %s153, %s154
      %p163 = scmp.eq.s32.totalorder %s38, 0
      %p164 = por %p162, %p163
      %p165 = scmp.ne.s32.totalorder %s153, %s154
      %p166 = scmp.eq.s32.totalorder %s39, 1
      %p167 = por %p165, %p166
      %p169 = scmp.ne.s32.totalorder %s154, %s168
      %p170 = scmp.eq.s32.totalorder %s39, 0
      %p171 = por %p169, %p170
      %s173 = sadd.s32 %s172, 1
      %p176 = scmp.eq.s32.totalorder %s33, 1
      %p177 = scmp.ne.s32.totalorder %s172, %s174
      %p178 = scmp.eq.s32.totalorder %s33, 0
      %p179 = por %p177, %p178
      %p180 = scmp.ne.s32.totalorder %s172, %s174
      %p181 = scmp.eq.s32.totalorder %s38, 1
      %p182 = por %p180, %p181
      %p183 = scmp.ne.s32.totalorder %s174, %s175
      %p184 = scmp.eq.s32.totalorder %s38, 0
      %p185 = por %p183, %p184
      %p186 = scmp.ne.s32.totalorder %s174, %s175
      %p187 = scmp.eq.s32.totalorder %s39, 1
      %p188 = por %p186, %p187
      %p190 = scmp.ne.s32.totalorder %s175, %s189
      %p191 = scmp.eq.s32.totalorder %s39, 0
      %p192 = por %p190, %p191
      %s194 = sadd.s32 %s193, 1
      %p197 = scmp.eq.s32.totalorder %s33, 1
      %p198 = scmp.ne.s32.totalorder %s193, %s195
      %p199 = scmp.eq.s32.totalorder %s33, 0
      %p200 = por %p198, %p199
      %p201 = scmp.ne.s32.totalorder %s193, %s195
      %p202 = scmp.eq.s32.totalorder %s38, 1
      %p203 = por %p201, %p202
      %p204 = scmp.ne.s32.totalorder %s195, %s196
      %p205 = scmp.eq.s32.totalorder %s38, 0
      %p206 = por %p204, %p205
      %p207 = scmp.ne.s32.totalorder %s195, %s196
      %p208 = scmp.eq.s32.totalorder %s39, 1
      %p209 = por %p207, %p208
      %p211 = scmp.ne.s32.totalorder %s196, %s210
      %p212 = scmp.eq.s32.totalorder %s39, 0
      %p213 = por %p211, %p212
      %s215 = sadd.s32 %s214, 1
      %p218 = scmp.eq.s32.totalorder %s33, 1
      %p219 = scmp.ne.s32.totalorder %s214, %s216
      %p220 = scmp.eq.s32.totalorder %s33, 0
      %p221 = por %p219, %p220
      %p222 = scmp.ne.s32.totalorder %s214, %s216
      %p223 = scmp.eq.s32.totalorder %s38, 1
      %p224 = por %p222, %p223
      %p225 = scmp.ne.s32.totalorder %s216, %s217
      %p226 = scmp.eq.s32.totalorder %s38, 0
      %p227 = por %p225, %p226
      %p228 = scmp.ne.s32.totalorder %s216, %s217
      %p229 = scmp.eq.s32.totalorder %s39, 1
      %p230 = por %p228, %p229
      %p232 = scmp.ne.s32.totalorder %s217, %s231
      %p233 = scmp.eq.s32.totalorder %s39, 0
      %p234 = por %p232, %p233
      %s236 = sadd.s32 %s235, 1
      %p239 = scmp.eq.s32.totalorder %s33, 1
      %p240 = scmp.ne.s32.totalorder %s235, %s237
      %p241 = scmp.eq.s32.totalorder %s33, 0
      %p242 = por %p240, %p241
      %p243 = scmp.ne.s32.totalorder %s235, %s237
      %p244 = scmp.eq.s32.totalorder %s38, 1
      %p245 = por %p243, %p244
      %p246 = scmp.ne.s32.totalorder %s237, %s238
      %p247 = scmp.eq.s32.totalorder %s38, 0
      %p248 = por %p246, %p247
      %p249 = scmp.ne.s32.totalorder %s237, %s238
      %p250 = scmp.eq.s32.totalorder %s39, 1
      %p251 = por %p249, %p250
      %p253 = scmp.ne.s32.totalorder %s238, %s252
      %p254 = scmp.eq.s32.totalorder %s39, 0
      %p255 = por %p253, %p254
      %s257 = sadd.s32 %s256, 1
      %p260 = scmp.eq.s32.totalorder %s33, 1
      %p261 = scmp.ne.s32.totalorder %s256, %s258
      %p262 = scmp.eq.s32.totalorder %s33, 0
      %p263 = por %p261, %p262
      %p264 = scmp.ne.s32.totalorder %s256, %s258
      %p265 = scmp.eq.s32.totalorder %s38, 1
      %p266 = por %p264, %p265
      %p267 = scmp.ne.s32.totalorder %s258, %s259
      %p268 = scmp.eq.s32.totalorder %s38, 0
      %p269 = por %p267, %p268
      %p270 = scmp.ne.s32.totalorder %s258, %s259
      %p271 = scmp.eq.s32.totalorder %s39, 1
      %p272 = por %p270, %p271
      %p274 = scmp.ne.s32.totalorder %s259, %s273
      %p275 = scmp.eq.s32.totalorder %s39, 0
      %p276 = por %p274, %p275
      %s278 = sadd.s32 %s277, 1
      %p281 = scmp.eq.s32.totalorder %s33, 1
      %p282 = scmp.ne.s32.totalorder %s277, %s279
      %p283 = scmp.eq.s32.totalorder %s33, 0
      %p284 = por %p282, %p283
      %p285 = scmp.ne.s32.totalorder %s277, %s279
      %p286 = scmp.eq.s32.totalorder %s38, 1
      %p287 = por %p285, %p286
      %p288 = scmp.ne.s32.totalorder %s279, %s280
      %p289 = scmp.eq.s32.totalorder %s38, 0
      %p290 = por %p288, %p289
      %p291 = scmp.ne.s32.totalorder %s279, %s280
      %p292 = scmp.eq.s32.totalorder %s39, 1
      %p293 = por %p291, %p292
      %p295 = scmp.ne.s32.totalorder %s280, %s294
      %p296 = scmp.eq.s32.totalorder %s39, 0
      %p297 = por %p295, %p296
      %s299 = sadd.s32 %s298, 1
      %p302 = scmp.eq.s32.totalorder %s33, 1
      %p303 = scmp.ne.s32.totalorder %s298, %s300
      %p304 = scmp.eq.s32.totalorder %s33, 0
      %p305 = por %p303, %p304
      %p306 = scmp.ne.s32.totalorder %s298, %s300
      %p307 = scmp.eq.s32.totalorder %s38, 1
      %p308 = por %p306, %p307
      %p309 = scmp.ne.s32.totalorder %s300, %s301
      %p310 = scmp.eq.s32.totalorder %s38, 0
      %p311 = por %p309, %p310
      %p312 = scmp.ne.s32.totalorder %s300, %s301
      %p313 = scmp.eq.s32.totalorder %s39, 1
      %p314 = por %p312, %p313
      %p316 = scmp.ne.s32.totalorder %s301, %s315
      %p317 = scmp.eq.s32.totalorder %s39, 0
      %p318 = por %p316, %p317
      %s320 = sadd.s32 %s319, 1
      %p323 = scmp.eq.s32.totalorder %s33, 1
      %p324 = scmp.ne.s32.totalorder %s319, %s321
      %p325 = scmp.eq.s32.totalorder %s33, 0
      %p326 = por %p324, %p325
      %p327 = scmp.ne.s32.totalorder %s319, %s321
      %p328 = scmp.eq.s32.totalorder %s38, 1
      %p329 = por %p327, %p328
      %p330 = scmp.ne.s32.totalorder %s321, %s322
      %p331 = scmp.eq.s32.totalorder %s38, 0
      %p332 = por %p330, %p331
      %p333 = scmp.ne.s32.totalorder %s321, %s322
      %p334 = scmp.eq.s32.totalorder %s39, 1
      %p335 = por %p333, %p334
      %p337 = scmp.ne.s32.totalorder %s322, %s336
      %p338 = scmp.eq.s32.totalorder %s39, 0
      %p339 = por %p337, %p338
      %s341 = sadd.s32 %s340, 1
      %p344 = scmp.eq.s32.totalorder %s33, 1
      %p345 = scmp.ne.s32.totalorder %s340, %s342
      %p346 = scmp.eq.s32.totalorder %s33, 0
      %p347 = por %p345, %p346
      %p348 = scmp.ne.s32.totalorder %s340, %s342
      %p349 = scmp.eq.s32.totalorder %s38, 1
      %p350 = por %p348, %p349
      %p351 = scmp.ne.s32.totalorder %s342, %s343
      %p352 = scmp.eq.s32.totalorder %s38, 0
      %p353 = por %p351, %p352
      %p354 = scmp.ne.s32.totalorder %s342, %s343
      %p355 = scmp.eq.s32.totalorder %s39, 1
      %p356 = por %p354, %p355
      %p358 = scmp.ne.s32.totalorder %s343, %s357
      %p359 = scmp.eq.s32.totalorder %s39, 0
      %p360 = por %p358, %p359
      %s362 = sadd.s32 %s361, 1
      %p365 = scmp.eq.s32.totalorder %s33, 1
      %p366 = scmp.ne.s32.totalorder %s361, %s363
      %p367 = scmp.eq.s32.totalorder %s33, 0
      %p368 = por %p366, %p367
      %p369 = scmp.ne.s32.totalorder %s361, %s363
      %p370 = scmp.eq.s32.totalorder %s38, 1
      %p371 = por %p369, %p370
      %p372 = scmp.ne.s32.totalorder %s363, %s364
      %p373 = scmp.eq.s32.totalorder %s38, 0
      %p374 = por %p372, %p373
      %p375 = scmp.ne.s32.totalorder %s363, %s364
      %p376 = scmp.eq.s32.totalorder %s39, 1
      %p377 = por %p375, %p376
      %p379 = scmp.ne.s32.totalorder %s364, %s378
      %p380 = scmp.eq.s32.totalorder %s39, 0
      %p381 = por %p379, %p380
      %s383 = sadd.s32 %s382, 1
      %p386 = scmp.eq.s32.totalorder %s33, 1
      %p387 = scmp.ne.s32.totalorder %s382, %s384
      %p388 = scmp.eq.s32.totalorder %s33, 0
      %p389 = por %p387, %p388
      %p390 = scmp.ne.s32.totalorder %s382, %s384
      %p391 = scmp.eq.s32.totalorder %s38, 1
      %p392 = por %p390, %p391
      %p393 = scmp.ne.s32.totalorder %s384, %s385
      %p394 = scmp.eq.s32.totalorder %s38, 0
      %p395 = por %p393, %p394
      %p396 = scmp.ne.s32.totalorder %s384, %s385
      %p397 = scmp.eq.s32.totalorder %s39, 1
      %p398 = por %p396, %p397
      %p400 = scmp.ne.s32.totalorder %s385, %s399
      %p401 = scmp.eq.s32.totalorder %s39, 0
      %p402 = por %p400, %p401
      %s403 = ssub.s32 %s33, %s40
      %p404 = scmp.eq.s32.totalorder %s403, 0
      %s406 = sadd.s32 %s405, 1
      %s407 = scalar_select %p404, %s405, %s406
      %p410 = pneg %p404
      %p411 = scmp.eq.s32.totalorder %s33, 1
      %p412 = por %p410, %p411
      %p413 = scmp.ne.s32.totalorder %s405, %s408
      %p414 = scmp.eq.s32.totalorder %s33, 0
      %p415 = por %p413, %p414
      %p416 = scmp.ne.s32.totalorder %s405, %s408
      %p417 = scmp.eq.s32.totalorder %s38, 1
      %p418 = por %p416, %p417
      %p419 = scmp.ne.s32.totalorder %s408, %s409
      %p420 = scmp.eq.s32.totalorder %s38, 0
      %p421 = por %p419, %p420
      %p422 = scmp.ne.s32.totalorder %s408, %s409
      %p423 = scmp.eq.s32.totalorder %s39, 1
      %p424 = por %p422, %p423
      %p426 = scmp.ne.s32.totalorder %s409, %s425
      %p427 = scmp.eq.s32.totalorder %s39, 0
      %p428 = por %p426, %p427
      %p429 = scmp.le.s32.totalorder 1, %s33
      %p430 = scmp.lt.s32.totalorder %s33, 3
      %p431 = pnand %p429, %p430
      %p432 = pneg %p431
      // Predicated region
      $region9: #{linear_autoencoder.1} parent=5 // pred_check
        _
      $region10: #{linear_autoencoder.1} parent=5 // pred_check_branch
        %434 = sbr.rel (%p431) target = $region12
      $region11: #{linear_autoencoder.1} parent=5 // pred_region
        %s435 = ssub.s32 %s33, 1
        // Predicated region
        $region13: #{linear_autoencoder.1} parent=11 // pred_check
          %p436 = pneg %p80
        $region14: #{linear_autoencoder.1} parent=11 // pred_check_branch
          %438 = sbr.rel (%p436) target = $region16
        $region15: #{linear_autoencoder.1} parent=11 // pred_region
          %s440 = ssub.s32 2048, 2048
          %441 = vsyncadd [#allocation6], %s440
          %s442 = sshll.u32 [#allocation5], 4
          %s443 = int_to_ptr.vmem [resolvable:$true] %s442
          %448 = dma.hbm_to_vmem [thread:$0]  %s1, 2048, %s443, [#allocation6], 64, 64, 4
        $region16: #{linear_autoencoder.1} parent=11 // pred_fallthru
          _
        // Predicated region
        $region17: #{linear_autoencoder.1} parent=11 // pred_check
          %p449 = pneg %p101
        $region18: #{linear_autoencoder.1} parent=11 // pred_check_branch
          %451 = sbr.rel (%p449) target = $region20
        $region19: #{linear_autoencoder.1} parent=11 // pred_region
          _
        $region20: #{linear_autoencoder.1} parent=11 // pred_fallthru
          _
        // Predicated region
        $region21: #{linear_autoencoder.1} parent=11 // pred_check
          %p452 = pneg %p122
        $region22: #{linear_autoencoder.1} parent=11 // pred_check_branch
          %454 = sbr.rel (%p452) target = $region24
        $region23: #{linear_autoencoder.1} parent=11 // pred_region
          %s456 = ssub.s32 1024, 1024
          %457 = vsyncadd [#allocation6], %s456
          %s458 = sshll.u32 [#allocation7], 4
          %s459 = int_to_ptr.vmem [resolvable:$true] %s458
          %464 = dma.hbm_to_vmem [thread:$0]  %s3, 1024, %s459, [#allocation6], 64, 64, 4
        $region24: #{linear_autoencoder.1} parent=11 // pred_fallthru
          _
        // Predicated region
        $region25: #{linear_autoencoder.1} parent=11 // pred_check
          %p465 = pneg %p143
        $region26: #{linear_autoencoder.1} parent=11 // pred_check_branch
          %467 = sbr.rel (%p465) target = $region28
        $region27: #{linear_autoencoder.1} parent=11 // pred_region
          _
        $region28: #{linear_autoencoder.1} parent=11 // pred_fallthru
          _
        // Predicated region
        $region29: #{linear_autoencoder.1} parent=11 // pred_check
          %p468 = pneg %p164
        $region30: #{linear_autoencoder.1} parent=11 // pred_check_branch
          %470 = sbr.rel (%p468) target = $region32
        $region31: #{linear_autoencoder.1} parent=11 // pred_region
          %s472 = ssub.s32 1024, 1024
          %473 = vsyncadd [#allocation9], %s472
          %s474 = sshll.u32 [#allocation8], 4
          %s475 = int_to_ptr.vmem [resolvable:$true] %s474
          %480 = dma.hbm_to_vmem [thread:$0]  %s5, 1024, %s475, [#allocation9], 64, 64, 4
        $region32: #{linear_autoencoder.1} parent=11 // pred_fallthru
          _
        // Predicated region
        $region33: #{linear_autoencoder.1} parent=11 // pred_check
          %p481 = pneg %p185
        $region34: #{linear_autoencoder.1} parent=11 // pred_check_branch
          %483 = sbr.rel (%p481) target = $region36
        $region35: #{linear_autoencoder.1} parent=11 // pred_region
          _
        $region36: #{linear_autoencoder.1} parent=11 // pred_fallthru
          _
        // Predicated region
        $region37: #{linear_autoencoder.1} parent=11 // pred_check
          %p484 = pneg %p206
        $region38: #{linear_autoencoder.1} parent=11 // pred_check_branch
          %486 = sbr.rel (%p484) target = $region40
        $region39: #{linear_autoencoder.1} parent=11 // pred_region
          %s488 = ssub.s32 1024, 1024
          %489 = vsyncadd [#allocation9], %s488
          %s490 = sshll.u32 [#allocation10], 4
          %s491 = int_to_ptr.vmem [resolvable:$true] %s490
          %496 = dma.hbm_to_vmem [thread:$0]  %s7, 1024, %s491, [#allocation9], 64, 64, 4
        $region40: #{linear_autoencoder.1} parent=11 // pred_fallthru
          _
        // Predicated region
        $region41: #{linear_autoencoder.1} parent=11 // pred_check
          %p497 = pneg %p227
        $region42: #{linear_autoencoder.1} parent=11 // pred_check_branch
          %499 = sbr.rel (%p497) target = $region44
        $region43: #{linear_autoencoder.1} parent=11 // pred_region
          _
        $region44: #{linear_autoencoder.1} parent=11 // pred_fallthru
          _
        // Predicated region
        $region45: #{linear_autoencoder.1} parent=11 // pred_check
          %p500 = pneg %p248
        $region46: #{linear_autoencoder.1} parent=11 // pred_check_branch
          %502 = sbr.rel (%p500) target = $region48
        $region47: #{linear_autoencoder.1} parent=11 // pred_region
          %s504 = ssub.s32 1024, 1024
          %505 = vsyncadd [#allocation12], %s504
          %s506 = sshll.u32 [#allocation11], 4
          %s507 = int_to_ptr.vmem [resolvable:$true] %s506
          %512 = dma.hbm_to_vmem [thread:$0]  %s9, 1024, %s507, [#allocation12], 64, 64, 4
        $region48: #{linear_autoencoder.1} parent=11 // pred_fallthru
          _
        // Predicated region
        $region49: #{linear_autoencoder.1} parent=11 // pred_check
          %p513 = pneg %p269
        $region50: #{linear_autoencoder.1} parent=11 // pred_check_branch
          %515 = sbr.rel (%p513) target = $region52
        $region51: #{linear_autoencoder.1} parent=11 // pred_region
          _
        $region52: #{linear_autoencoder.1} parent=11 // pred_fallthru
          _
        // Predicated region
        $region53: #{linear_autoencoder.1} parent=11 // pred_check
          %p516 = pneg %p290
        $region54: #{linear_autoencoder.1} parent=11 // pred_check_branch
          %518 = sbr.rel (%p516) target = $region56
        $region55: #{linear_autoencoder.1} parent=11 // pred_region
          %s520 = ssub.s32 1024, 1024
          %521 = vsyncadd [#allocation12], %s520
          %s522 = sshll.u32 [#allocation13], 4
          %s523 = int_to_ptr.vmem [resolvable:$true] %s522
          %528 = dma.hbm_to_vmem [thread:$0]  %s11, 1024, %s523, [#allocation12], 64, 64, 4
        $region56: #{linear_autoencoder.1} parent=11 // pred_fallthru
          _
        // Predicated region
        $region57: #{linear_autoencoder.1} parent=11 // pred_check
          %p529 = pneg %p311
        $region58: #{linear_autoencoder.1} parent=11 // pred_check_branch
          %531 = sbr.rel (%p529) target = $region60
        $region59: #{linear_autoencoder.1} parent=11 // pred_region
          _
        $region60: #{linear_autoencoder.1} parent=11 // pred_fallthru
          _
        // Predicated region
        $region61: #{linear_autoencoder.1} parent=11 // pred_check
          %p532 = pneg %p332
        $region62: #{linear_autoencoder.1} parent=11 // pred_check_branch
          %534 = sbr.rel (%p532) target = $region64
        $region63: #{linear_autoencoder.1} parent=11 // pred_region
          %s536 = ssub.s32 1024, 1024
          %537 = vsyncadd [#allocation15], %s536
          %s538 = sshll.u32 [#allocation14], 4
          %s539 = int_to_ptr.vmem [resolvable:$true] %s538
          %544 = dma.hbm_to_vmem [thread:$0]  %s13, 1024, %s539, [#allocation15], 64, 64, 4
        $region64: #{linear_autoencoder.1} parent=11 // pred_fallthru
          _
        // Predicated region
        $region65: #{linear_autoencoder.1} parent=11 // pred_check
          %p545 = pneg %p353
        $region66: #{linear_autoencoder.1} parent=11 // pred_check_branch
          %547 = sbr.rel (%p545) target = $region68
        $region67: #{linear_autoencoder.1} parent=11 // pred_region
          _
        $region68: #{linear_autoencoder.1} parent=11 // pred_fallthru
          _
        // Predicated region
        $region69: #{linear_autoencoder.1} parent=11 // pred_check
          %p548 = pneg %p374
        $region70: #{linear_autoencoder.1} parent=11 // pred_check_branch
          %550 = sbr.rel (%p548) target = $region72
        $region71: #{linear_autoencoder.1} parent=11 // pred_region
          %s552 = ssub.s32 2048, 2048
          %553 = vsyncadd [#allocation15], %s552
          %s554 = sshll.u32 [#allocation16], 4
          %s555 = int_to_ptr.vmem [resolvable:$true] %s554
          %560 = dma.hbm_to_vmem [thread:$0]  %s15, 2048, %s555, [#allocation15], 128, 128, 8
        $region72: #{linear_autoencoder.1} parent=11 // pred_fallthru
          _
        // Predicated region
        $region73: #{linear_autoencoder.1} parent=11 // pred_check
          %p561 = pneg %p395
        $region74: #{linear_autoencoder.1} parent=11 // pred_check_branch
          %563 = sbr.rel (%p561) target = $region76
        $region75: #{linear_autoencoder.1} parent=11 // pred_region
          _
        $region76: #{linear_autoencoder.1} parent=11 // pred_fallthru
          _
      $region12: #{linear_autoencoder.1} parent=5 // pred_fallthru
        _
      %p564 = scmp.lt.s32.totalorder %s33, 2
      // Predicated region
      $region77: #{linear_autoencoder.1} parent=5 // pred_check
        %p565 = pneg %p564
      $region78: #{linear_autoencoder.1} parent=5 // pred_check_branch
        %567 = sbr.rel (%p565) target = $region80
      $region79: #{linear_autoencoder.1} parent=5 // pred_region
        // Predicated region
        $region81: #{linear_autoencoder.1} parent=79 // pred_check
          %p568 = pneg %p53
        $region82: #{linear_autoencoder.1} parent=79 // pred_check_branch
          %570 = sbr.rel (%p568) target = $region84
        $region83: #{linear_autoencoder.1} parent=79 // pred_region
          %s571 = sand.u32 %s43, 1
          %s572 = scalar_lea.sflag [#allocation3], %s571
          %s573 = sand.u32 %s43, 1
          %s574 = smul.addr %s573, 256
          %s575 = scalar_lea.vmem [#allocation2], %s574
          %s576 = smul.u32 16, %s33
          %s578 = ssub.s32 4096, 4096
          %579 = vsyncadd %s572, %s578
          %s580 = smul.addr %s576, 2
          %s581 = smul.addr %s580, 128
          %s582 = scalar_lea.hbm %s0, %s581
          %s583 = sshll.u32 %s575, 4
          %s584 = int_to_ptr.vmem [resolvable:$true] %s583
          %589 = dma.hbm_to_vmem [thread:$0]  %s582, 4096, %s584, %s572, 256, 256, 16
        $region84: #{linear_autoencoder.1} parent=79 // pred_fallthru
          _
      $region80: #{linear_autoencoder.1} parent=5 // pred_fallthru
        _
      %p590 = scmp.le.s32.totalorder 1, %s33
      %p591 = scmp.lt.s32.totalorder %s33, 3
      %p592 = pnand %p590, %p591
      %p593 = pneg %p592
      // Predicated region
      $region85: #{linear_autoencoder.1} parent=5 // pred_check
        _
      $region86: #{linear_autoencoder.1} parent=5 // pred_check_branch
        %595 = sbr.rel (%p592) target = $region88
      $region87: #{linear_autoencoder.1} parent=5 // pred_region
        %s596 = ssub.s32 %s33, 1
        %s597 = sand.u32 %s46, 1
        %s598 = scalar_lea.sflag [#allocation3], %s597
        %s599 = sand.u32 %s46, 1
        %s600 = smul.addr %s599, 256
        %s601 = scalar_lea.vmem [#allocation2], %s600
        // Predicated region
        $region89: #{linear_autoencoder.1} parent=87 // pred_check
          %p602 = pneg %p59
        $region90: #{linear_autoencoder.1} parent=87 // pred_check_branch
          %604 = sbr.rel (%p602) target = $region92
        $region91: #{linear_autoencoder.1} parent=87 // pred_region
          %605 = dma.done %s598, 4096
        $region92: #{linear_autoencoder.1} parent=87 // pred_fallthru
          _
        // Predicated region
        $region93: #{linear_autoencoder.1} parent=87 // pred_check
          %p606 = pneg %p80
        $region94: #{linear_autoencoder.1} parent=87 // pred_check_branch
          %608 = sbr.rel (%p606) target = $region96
        $region95: #{linear_autoencoder.1} parent=87 // pred_region
          %609 = dma.done [#allocation6], 2048
        $region96: #{linear_autoencoder.1} parent=87 // pred_fallthru
          _
        // Predicated region
        $region97: #{linear_autoencoder.1} parent=87 // pred_check
          %p610 = pneg %p122
        $region98: #{linear_autoencoder.1} parent=87 // pred_check_branch
          %612 = sbr.rel (%p610) target = $region100
        $region99: #{linear_autoencoder.1} parent=87 // pred_region
          %613 = dma.done [#allocation6], 1024
        $region100: #{linear_autoencoder.1} parent=87 // pred_fallthru
          _
        // Predicated region
        $region101: #{linear_autoencoder.1} parent=87 // pred_check
          %p614 = pneg %p164
        $region102: #{linear_autoencoder.1} parent=87 // pred_check_branch
          %616 = sbr.rel (%p614) target = $region104
        $region103: #{linear_autoencoder.1} parent=87 // pred_region
          %617 = dma.done [#allocation9], 1024
        $region104: #{linear_autoencoder.1} parent=87 // pred_fallthru
          _
        // Predicated region
        $region105: #{linear_autoencoder.1} parent=87 // pred_check
          %p618 = pneg %p206
        $region106: #{linear_autoencoder.1} parent=87 // pred_check_branch
          %620 = sbr.rel (%p618) target = $region108
        $region107: #{linear_autoencoder.1} parent=87 // pred_region
          %621 = dma.done [#allocation9], 1024
        $region108: #{linear_autoencoder.1} parent=87 // pred_fallthru
          _
        // Predicated region
        $region109: #{linear_autoencoder.1} parent=87 // pred_check
          %p622 = pneg %p248
        $region110: #{linear_autoencoder.1} parent=87 // pred_check_branch
          %624 = sbr.rel (%p622) target = $region112
        $region111: #{linear_autoencoder.1} parent=87 // pred_region
          %625 = dma.done [#allocation12], 1024
        $region112: #{linear_autoencoder.1} parent=87 // pred_fallthru
          _
        // Predicated region
        $region113: #{linear_autoencoder.1} parent=87 // pred_check
          %p626 = pneg %p290
        $region114: #{linear_autoencoder.1} parent=87 // pred_check_branch
          %628 = sbr.rel (%p626) target = $region116
        $region115: #{linear_autoencoder.1} parent=87 // pred_region
          %629 = dma.done [#allocation12], 1024
        $region116: #{linear_autoencoder.1} parent=87 // pred_fallthru
          _
        // Predicated region
        $region117: #{linear_autoencoder.1} parent=87 // pred_check
          %p630 = pneg %p332
        $region118: #{linear_autoencoder.1} parent=87 // pred_check_branch
          %632 = sbr.rel (%p630) target = $region120
        $region119: #{linear_autoencoder.1} parent=87 // pred_region
          %633 = dma.done [#allocation15], 1024
        $region120: #{linear_autoencoder.1} parent=87 // pred_fallthru
          _
        // Predicated region
        $region121: #{linear_autoencoder.1} parent=87 // pred_check
          %p634 = pneg %p374
        $region122: #{linear_autoencoder.1} parent=87 // pred_check_branch
          %636 = sbr.rel (%p634) target = $region124
        $region123: #{linear_autoencoder.1} parent=87 // pred_region
          %637 = dma.done [#allocation15], 2048
        $region124: #{linear_autoencoder.1} parent=87 // pred_fallthru
          _
        %s638 = sand.u32 %s46, 1
        %s639 = scalar_lea.sflag [#allocation3], %s638
        %s640 = sand.u32 %s46, 1
        %s641 = smul.addr %s640, 256
        %s642 = scalar_lea.vmem [#allocation2], %s641
        %p643 = pneg %p59
        %p644 = pneg %p56
        %p645 = pneg %p80
        %p646 = pneg %p77
        %p647 = pneg %p101
        %p648 = pneg %p98
        %p649 = pneg %p122
        %p650 = pneg %p119
        %p651 = pneg %p143
        %p652 = pneg %p140
        %p653 = pneg %p164
        %p654 = pneg %p161
        %p655 = pneg %p185
        %p656 = pneg %p182
        %p657 = pneg %p206
        %p658 = pneg %p203
        %p659 = pneg %p227
        %p660 = pneg %p224
        %p661 = pneg %p248
        %p662 = pneg %p245
        %p663 = pneg %p269
        %p664 = pneg %p266
        %p665 = pneg %p290
        %p666 = pneg %p287
        %p667 = pneg %p311
        %p668 = pneg %p308
        %p669 = pneg %p332
        %p670 = pneg %p329
        %p671 = pneg %p353
        %p672 = pneg %p350
        %p673 = pneg %p374
        %p674 = pneg %p371
        %p675 = pneg %p395
        %p676 = pneg %p392
        %p677 = pneg %p421
        %p678 = pneg %p418
        %s679 = sand.u32 %s408, 1
        %s680 = scalar_lea.sflag [#allocation4], %s679
        %s681 = sand.u32 %s408, 1
        %s682 = smul.addr %s681, 256
        %s683 = scalar_lea.vmem [#allocation17], %s682
        %s684 = smul.u32 16, %s38
        %s685 = smul.u32 16, %s38
        %v687 = vld [vmem:[%s601] sm:$0xff]
        %v688 = vld [vmem:[%s601 + $0x8] sm:$0xff]
        %v689 = vld [vmem:[%s601 + $0x10] sm:$0xff]
        %v690 = vld [vmem:[%s601 + $0x18] sm:$0xff]
        %v691 = vld [vmem:[%s601 + $0x20] sm:$0xff]
        %v692 = vld [vmem:[%s601 + $0x28] sm:$0xff]
        %v693 = vld [vmem:[%s601 + $0x30] sm:$0xff]
        %v694 = vld [vmem:[%s601 + $0x38] sm:$0xff]
        %v695 = vld [vmem:[%s601 + $0x40] sm:$0xff]
        %v696 = vld [vmem:[%s601 + $0x48] sm:$0xff]
        %v697 = vld [vmem:[%s601 + $0x50] sm:$0xff]
        %v698 = vld [vmem:[%s601 + $0x58] sm:$0xff]
        %v699 = vld [vmem:[%s601 + $0x60] sm:$0xff]
        %v700 = vld [vmem:[%s601 + $0x68] sm:$0xff]
        %v701 = vld [vmem:[%s601 + $0x70] sm:$0xff]
        %v702 = vld [vmem:[%s601 + $0x78] sm:$0xff]
        %v703 = vld [vmem:[%s601 + $0x80] sm:$0xff]
        %v704 = vld [vmem:[%s601 + $0x88] sm:$0xff]
        %v705 = vld [vmem:[%s601 + $0x90] sm:$0xff]
        %v706 = vld [vmem:[%s601 + $0x98] sm:$0xff]
        %v707 = vld [vmem:[%s601 + $0xa0] sm:$0xff]
        %v708 = vld [vmem:[%s601 + $0xa8] sm:$0xff]
        %v709 = vld [vmem:[%s601 + $0xb0] sm:$0xff]
        %v710 = vld [vmem:[%s601 + $0xb8] sm:$0xff]
        %v711 = vld [vmem:[%s601 + $0xc0] sm:$0xff]
        %v712 = vld [vmem:[%s601 + $0xc8] sm:$0xff]
        %v713 = vld [vmem:[%s601 + $0xd0] sm:$0xff]
        %v714 = vld [vmem:[%s601 + $0xd8] sm:$0xff]
        %v715 = vld [vmem:[%s601 + $0xe0] sm:$0xff]
        %v716 = vld [vmem:[%s601 + $0xe8] sm:$0xff]
        %v717 = vld [vmem:[%s601 + $0xf0] sm:$0xff]
        %v718 = vld [vmem:[%s601 + $0xf8] sm:$0xff]
        %v719 = vpack.c.bf16 %v689, %v687
        %v720 = vpack.c.bf16 %v690, %v688
        %v721 = vpack.c.bf16 %v693, %v691
        %v722 = vpack.c.bf16 %v694, %v692
        %v723 = vpack.c.bf16 %v697, %v695
        %v724 = vpack.c.bf16 %v698, %v696
        %v725 = vpack.c.bf16 %v701, %v699
        %v726 = vpack.c.bf16 %v702, %v700
        %v727 = vpack.c.bf16 %v705, %v703
        %v728 = vpack.c.bf16 %v706, %v704
        %v729 = vpack.c.bf16 %v709, %v707
        %v730 = vpack.c.bf16 %v710, %v708
        %v731 = vpack.c.bf16 %v713, %v711
        %v732 = vpack.c.bf16 %v714, %v712
        %v733 = vpack.c.bf16 %v717, %v715
        %v734 = vpack.c.bf16 %v718, %v716
        %v735 = vld [vmem:[#allocation5] sm:$0xf]
        %v736 = vld [vmem:[#allocation5 + $0x4] sm:$0xf]
        %v737 = vld [vmem:[#allocation5 + $0x8] sm:$0xf]
        %v738 = vld [vmem:[#allocation5 + $0xc] sm:$0xf]
        %v739 = vld [vmem:[#allocation5 + $0x10] sm:$0xf]
        %v740 = vld [vmem:[#allocation5 + $0x14] sm:$0xf]
        %v741 = vld [vmem:[#allocation5 + $0x18] sm:$0xf]
        %v742 = vld [vmem:[#allocation5 + $0x1c] sm:$0xf]
        %v743 = vld [vmem:[#allocation5 + $0x20] sm:$0xf]
        %v744 = vld [vmem:[#allocation5 + $0x24] sm:$0xf]
        %v745 = vld [vmem:[#allocation5 + $0x28] sm:$0xf]
        %v746 = vld [vmem:[#allocation5 + $0x2c] sm:$0xf]
        %v747 = vld [vmem:[#allocation5 + $0x30] sm:$0xf]
        %v748 = vld [vmem:[#allocation5 + $0x34] sm:$0xf]
        %v749 = vld [vmem:[#allocation5 + $0x38] sm:$0xf]
        %v750 = vld [vmem:[#allocation5 + $0x3c] sm:$0xf]
        %v751 = vld [vmem:[#allocation5 + $0x40] sm:$0xf]
        %v752 = vld [vmem:[#allocation5 + $0x44] sm:$0xf]
        %v753 = vld [vmem:[#allocation5 + $0x48] sm:$0xf]
        %v754 = vld [vmem:[#allocation5 + $0x4c] sm:$0xf]
        %v755 = vld [vmem:[#allocation5 + $0x50] sm:$0xf]
        %v756 = vld [vmem:[#allocation5 + $0x54] sm:$0xf]
        %v757 = vld [vmem:[#allocation5 + $0x58] sm:$0xf]
        %v758 = vld [vmem:[#allocation5 + $0x5c] sm:$0xf]
        %v759 = vld [vmem:[#allocation5 + $0x60] sm:$0xf]
        %v760 = vld [vmem:[#allocation5 + $0x64] sm:$0xf]
        %v761 = vld [vmem:[#allocation5 + $0x68] sm:$0xf]
        %v762 = vld [vmem:[#allocation5 + $0x6c] sm:$0xf]
        %v763 = vld [vmem:[#allocation5 + $0x70] sm:$0xf]
        %v764 = vld [vmem:[#allocation5 + $0x74] sm:$0xf]
        %v765 = vld [vmem:[#allocation5 + $0x78] sm:$0xf]
        %v766 = vld [vmem:[#allocation5 + $0x7c] sm:$0xf]
        %v767 = vld [vmem:[%s2] sm:$0x1]
        %v769 = vlaneseq
        %v770 = vshrl.u32 %v769, 7
        %v771 = vsub.s32 0, %v770
        %v772 = vrot.slane %v767, %v771
        %v806 = vunpack.c.l.b16 %v735
        %v807 = vunpack.c.l.b16 %v736
        %v808 = vunpack.c.l.b16 %v737
        %v809 = vunpack.c.l.b16 %v738
        %v810 = vunpack.c.l.b16 %v739
        %v811 = vunpack.c.l.b16 %v740
        %v812 = vunpack.c.l.b16 %v741
        %v813 = vunpack.c.l.b16 %v742
        %v814 = vunpack.c.l.b16 %v743
        %v815 = vunpack.c.l.b16 %v744
        %v816 = vunpack.c.l.b16 %v745
        %v817 = vunpack.c.l.b16 %v746
        %v818 = vunpack.c.l.b16 %v747
        %v819 = vunpack.c.l.b16 %v748
        %v820 = vunpack.c.l.b16 %v749
        %v821 = vunpack.c.l.b16 %v750
        %v822 = vunpack.c.l.b16 %v751
        %v823 = vunpack.c.l.b16 %v752
        %v824 = vunpack.c.l.b16 %v753
        %v825 = vunpack.c.l.b16 %v754
        %v826 = vunpack.c.l.b16 %v755
        %v827 = vunpack.c.l.b16 %v756
        %v828 = vunpack.c.l.b16 %v757
        %v829 = vunpack.c.l.b16 %v758
        %v830 = vunpack.c.l.b16 %v759
        %v831 = vunpack.c.l.b16 %v760
        %v832 = vunpack.c.l.b16 %v761
        %v833 = vunpack.c.l.b16 %v762
        %v834 = vunpack.c.l.b16 %v763
        %v835 = vunpack.c.l.b16 %v764
        %v836 = vunpack.c.l.b16 %v765
        %v837 = vunpack.c.l.b16 %v766
        %v838 = vpack.c.b16 %v807, %v806
        %v839 = vpack.c.b16 %v809, %v808
        %v840 = vpack.c.b16 %v811, %v810
        %v841 = vpack.c.b16 %v813, %v812
        %v842 = vpack.c.b16 %v815, %v814
        %v843 = vpack.c.b16 %v817, %v816
        %v844 = vpack.c.b16 %v819, %v818
        %v845 = vpack.c.b16 %v821, %v820
        %v846 = vpack.c.b16 %v823, %v822
        %v847 = vpack.c.b16 %v825, %v824
        %v848 = vpack.c.b16 %v827, %v826
        %v849 = vpack.c.b16 %v829, %v828
        %v850 = vpack.c.b16 %v831, %v830
        %v851 = vpack.c.b16 %v833, %v832
        %v852 = vpack.c.b16 %v835, %v834
        %v853 = vpack.c.b16 %v837, %v836
        %870 = vmatprep.subr.bf16.mxu0 0
        %871 = vmatpush1.bf16.msra.mxu0 %v838
        %872 = vmatprep.subr.bf16.mxu0 0
        %873 = vmatpush1.bf16.msra.mxu0 %v839
        %874 = vmatprep.subr.bf16.mxu0 0
        %875 = vmatpush1.bf16.msra.mxu0 %v840
        %876 = vmatprep.subr.bf16.mxu0 0
        %877 = vmatpush1.bf16.msra.mxu0 %v841
        %878 = vmatprep.subr.bf16.mxu0 0
        %879 = vmatpush1.bf16.msra.mxu0 %v842
        %880 = vmatprep.subr.bf16.mxu0 0
        %881 = vmatpush1.bf16.msra.mxu0 %v843
        %882 = vmatprep.subr.bf16.mxu0 0
        %883 = vmatpush1.bf16.msra.mxu0 %v844
        %884 = vmatprep.subr.bf16.mxu0 0
        %885 = vmatpush1.bf16.msra.mxu0 %v845
        %886 = vmatprep.subr.bf16.mxu0 0
        %887 = vmatpush1.bf16.msra.mxu0 %v846
        %888 = vmatprep.subr.bf16.mxu0 0
        %889 = vmatpush1.bf16.msra.mxu0 %v847
        %890 = vmatprep.subr.bf16.mxu0 0
        %891 = vmatpush1.bf16.msra.mxu0 %v848
        %892 = vmatprep.subr.bf16.mxu0 0
        %893 = vmatpush1.bf16.msra.mxu0 %v849
        %894 = vmatprep.subr.bf16.mxu0 0
        %895 = vmatpush1.bf16.msra.mxu0 %v850
        %896 = vmatprep.subr.bf16.mxu0 0
        %897 = vmatpush1.bf16.msra.mxu0 %v851
        %898 = vmatprep.subr.bf16.mxu0 0
        %899 = vmatpush1.bf16.msra.mxu0 %v852
        %900 = vmatprep.subr.bf16.mxu0 0
        %901 = vmatpush1.bf16.msra.mxu0 %v853
        %902 = vmatprep.mubr.bf16.mxu0 %v720
        %903 = vmatmul.mubr.bf16.gmra.mrb[0].mxu0 %v719
        %v904 = vpop.f32.mrb[0].mxu0
        %v905 = vadd.f32 %v772, %v904
        %v906 = vpop.f32.mrb[0].mxu0
        %v907 = vpop.f32.mrb[0].mxu0
        %v908 = vadd.f32 %v772, %v907
        %v909 = vpop.f32.mrb[0].mxu0
        %910 = vmatprep.mubr.bf16.mxu0 %v722
        %911 = vmatmul.mubr.bf16.gmra.mrb[0].mxu0 %v721
        %v912 = vpop.f32.mrb[0].mxu0
        %v913 = vadd.f32 %v772, %v912
        %v914 = vpop.f32.mrb[0].mxu0
        %v915 = vpop.f32.mrb[0].mxu0
        %v916 = vadd.f32 %v772, %v915
        %v917 = vpop.f32.mrb[0].mxu0
        %918 = vmatprep.mubr.bf16.mxu0 %v724
        %919 = vmatmul.mubr.bf16.gmra.mrb[0].mxu0 %v723
        %v920 = vpop.f32.mrb[0].mxu0
        %v921 = vadd.f32 %v772, %v920
        %v922 = vpop.f32.mrb[0].mxu0
        %v923 = vpop.f32.mrb[0].mxu0
        %v924 = vadd.f32 %v772, %v923
        %v925 = vpop.f32.mrb[0].mxu0
        %926 = vmatprep.mubr.bf16.mxu0 %v726
        %927 = vmatmul.mubr.bf16.gmra.mrb[0].mxu0 %v725
        %v928 = vpop.f32.mrb[0].mxu0
        %v929 = vadd.f32 %v772, %v928
        %v930 = vpop.f32.mrb[0].mxu0
        %v931 = vpop.f32.mrb[0].mxu0
        %v932 = vadd.f32 %v772, %v931
        %v933 = vpop.f32.mrb[0].mxu0
        %934 = vmatprep.mubr.bf16.mxu0 %v728
        %935 = vmatmul.mubr.bf16.gmra.mrb[0].mxu0 %v727
        %v936 = vpop.f32.mrb[0].mxu0
        %v937 = vadd.f32 %v772, %v936
        %v938 = vpop.f32.mrb[0].mxu0
        %v939 = vpop.f32.mrb[0].mxu0
        %v940 = vadd.f32 %v772, %v939
        %v941 = vpop.f32.mrb[0].mxu0
        %942 = vmatprep.mubr.bf16.mxu0 %v730
        %943 = vmatmul.mubr.bf16.gmra.mrb[0].mxu0 %v729
        %v944 = vpop.f32.mrb[0].mxu0
        %v945 = vadd.f32 %v772, %v944
        %v946 = vpop.f32.mrb[0].mxu0
        %v947 = vpop.f32.mrb[0].mxu0
        %v948 = vadd.f32 %v772, %v947
        %v949 = vpop.f32.mrb[0].mxu0
        %950 = vmatprep.mubr.bf16.mxu0 %v732
        %951 = vmatmul.mubr.bf16.gmra.mrb[0].mxu0 %v731
        %v952 = vpop.f32.mrb[0].mxu0
        %v953 = vadd.f32 %v772, %v952
        %v954 = vpop.f32.mrb[0].mxu0
        %v955 = vpop.f32.mrb[0].mxu0
        %v956 = vadd.f32 %v772, %v955
        %v957 = vpop.f32.mrb[0].mxu0
        %958 = vmatprep.mubr.bf16.mxu0 %v734
        %959 = vmatmul.mubr.bf16.gmra.mrb[0].mxu0 %v733
        %v960 = vpop.f32.mrb[0].mxu0
        %v961 = vadd.f32 %v772, %v960
        %v962 = vpop.f32.mrb[0].mxu0
        %v963 = vpop.f32.mrb[0].mxu0
        %v964 = vadd.f32 %v772, %v963
        %v965 = vpop.f32.mrb[0].mxu0
        %966 = vdwg.mxu0
        %v967 = vmax.f32 %v905, 0.0
        %v968 = vmax.f32 %v908, 0.0
        %v969 = vmax.f32 %v913, 0.0
        %v970 = vmax.f32 %v916, 0.0
        %v971 = vmax.f32 %v921, 0.0
        %v972 = vmax.f32 %v924, 0.0
        %v973 = vmax.f32 %v929, 0.0
        %v974 = vmax.f32 %v932, 0.0
        %v975 = vmax.f32 %v937, 0.0
        %v976 = vmax.f32 %v940, 0.0
        %v977 = vmax.f32 %v945, 0.0
        %v978 = vmax.f32 %v948, 0.0
        %v979 = vmax.f32 %v953, 0.0
        %v980 = vmax.f32 %v956, 0.0
        %v981 = vmax.f32 %v961, 0.0
        %v982 = vmax.f32 %v964, 0.0
        %v983 = vpack.c.bf16 %v968, %v967
        %v984 = vpack.c.bf16 %v970, %v969
        %v985 = vpack.c.bf16 %v972, %v971
        %v986 = vpack.c.bf16 %v974, %v973
        %v987 = vpack.c.bf16 %v976, %v975
        %v988 = vpack.c.bf16 %v978, %v977
        %v989 = vpack.c.bf16 %v980, %v979
        %v990 = vpack.c.bf16 %v982, %v981
        %v991 = vld [vmem:[#allocation7] sm:$0xf]
        %v992 = vld [vmem:[#allocation7 + $0x4] sm:$0xf]
        %v993 = vld [vmem:[#allocation7 + $0x8] sm:$0xf]
        %v994 = vld [vmem:[#allocation7 + $0xc] sm:$0xf]
        %v995 = vld [vmem:[#allocation7 + $0x10] sm:$0xf]
        %v996 = vld [vmem:[#allocation7 + $0x14] sm:$0xf]
        %v997 = vld [vmem:[#allocation7 + $0x18] sm:$0xf]
        %v998 = vld [vmem:[#allocation7 + $0x1c] sm:$0xf]
        %v999 = vld [vmem:[#allocation7 + $0x20] sm:$0xf]
        %v1000 = vld [vmem:[#allocation7 + $0x24] sm:$0xf]
        %v1001 = vld [vmem:[#allocation7 + $0x28] sm:$0xf]
        %v1002 = vld [vmem:[#allocation7 + $0x2c] sm:$0xf]
        %v1003 = vld [vmem:[#allocation7 + $0x30] sm:$0xf]
        %v1004 = vld [vmem:[#allocation7 + $0x34] sm:$0xf]
        %v1005 = vld [vmem:[#allocation7 + $0x38] sm:$0xf]
        %v1006 = vld [vmem:[#allocation7 + $0x3c] sm:$0xf]
        %v1007 = vld [vmem:[%s4] sm:$0x1]
        %v1009 = vlaneseq
        %v1010 = vshrl.u32 %v1009, 7
        %v1011 = vsub.s32 0, %v1010
        %v1012 = vrot.slane %v1007, %v1011
        %v1030 = vunpack.c.l.b16 %v991
        %v1031 = vunpack.c.l.b16 %v992
        %v1032 = vunpack.c.l.b16 %v993
        %v1033 = vunpack.c.l.b16 %v994
        %v1034 = vunpack.c.l.b16 %v995
        %v1035 = vunpack.c.l.b16 %v996
        %v1036 = vunpack.c.l.b16 %v997
        %v1037 = vunpack.c.l.b16 %v998
        %v1038 = vunpack.c.l.b16 %v999
        %v1039 = vunpack.c.l.b16 %v1000
        %v1040 = vunpack.c.l.b16 %v1001
        %v1041 = vunpack.c.l.b16 %v1002
        %v1042 = vunpack.c.l.b16 %v1003
        %v1043 = vunpack.c.l.b16 %v1004
        %v1044 = vunpack.c.l.b16 %v1005
        %v1045 = vunpack.c.l.b16 %v1006
        %v1046 = vpack.c.b16 %v1031, %v1030
        %v1047 = vpack.c.b16 %v1033, %v1032
        %v1048 = vpack.c.b16 %v1035, %v1034
        %v1049 = vpack.c.b16 %v1037, %v1036
        %v1050 = vpack.c.b16 %v1039, %v1038
        %v1051 = vpack.c.b16 %v1041, %v1040
        %v1052 = vpack.c.b16 %v1043, %v1042
        %v1053 = vpack.c.b16 %v1045, %v1044
        %1062 = vmatprep.subr.bf16.mxu0 0
        %1063 = vmatpush1.bf16.msra.mxu0 %v1046
        %1064 = vmatprep.subr.bf16.mxu0 0
        %1065 = vmatpush1.bf16.msra.mxu0 %v1047
        %1066 = vmatprep.subr.bf16.mxu0 0
        %1067 = vmatpush1.bf16.msra.mxu0 %v1048
        %1068 = vmatprep.subr.bf16.mxu0 0
        %1069 = vmatpush1.bf16.msra.mxu0 %v1049
        %1070 = vmatprep.subr.bf16.mxu0 0
        %1071 = vmatpush1.bf16.msra.mxu0 %v1050
        %1072 = vmatprep.subr.bf16.mxu0 0
        %1073 = vmatpush1.bf16.msra.mxu0 %v1051
        %1074 = vmatprep.subr.bf16.mxu0 0
        %1075 = vmatpush1.bf16.msra.mxu0 %v1052
        %1076 = vmatprep.subr.bf16.mxu0 0
        %1077 = vmatpush1.bf16.msra.mxu0 %v1053
        %1078 = vmatprep.subr.bf16.mxu0 0
        %1079 = vmatpush1.bf16.msra.mxu0 0
        %1080 = vmatprep.subr.bf16.mxu0 0
        %1081 = vmatpush1.bf16.msra.mxu0 0
        %1082 = vmatprep.subr.bf16.mxu0 0
        %1083 = vmatpush1.bf16.msra.mxu0 0
        %1084 = vmatprep.subr.bf16.mxu0 0
        %1085 = vmatpush1.bf16.msra.mxu0 0
        %1086 = vmatprep.subr.bf16.mxu0 0
        %1087 = vmatpush1.bf16.msra.mxu0 0
        %1088 = vmatprep.subr.bf16.mxu0 0
        %1089 = vmatpush1.bf16.msra.mxu0 0
        %1090 = vmatprep.subr.bf16.mxu0 0
        %1091 = vmatpush1.bf16.msra.mxu0 0
        %1092 = vmatprep.subr.bf16.mxu0 0
        %1093 = vmatpush1.bf16.msra.mxu0 0
        %1094 = vmatprep.mubr.bf16.mxu0 0
        %1095 = vmatmul.mubr.bf16.gmra.mrb[0].mxu0 %v983
        %v1096 = vpop.f32.mrb[0].mxu0
        %v1097 = vadd.f32 %v1012, %v1096
        %v1098 = vpop.f32.mrb[0].mxu0
        %v1099 = vpop.f32.mrb[0].mxu0
        %v1100 = vadd.f32 %v1012, %v1099
        %v1101 = vpop.f32.mrb[0].mxu0
        %1102 = vmatprep.mubr.bf16.mxu0 0
        %1103 = vmatmul.mubr.bf16.gmra.mrb[0].mxu0 %v984
        %v1104 = vpop.f32.mrb[0].mxu0
        %v1105 = vadd.f32 %v1012, %v1104
        %v1106 = vpop.f32.mrb[0].mxu0
        %v1107 = vpop.f32.mrb[0].mxu0
        %v1108 = vadd.f32 %v1012, %v1107
        %v1109 = vpop.f32.mrb[0].mxu0
        %1110 = vmatprep.mubr.bf16.mxu0 0
        %1111 = vmatmul.mubr.bf16.gmra.mrb[0].mxu0 %v985
        %v1112 = vpop.f32.mrb[0].mxu0
        %v1113 = vadd.f32 %v1012, %v1112
        %v1114 = vpop.f32.mrb[0].mxu0
        %v1115 = vpop.f32.mrb[0].mxu0
        %v1116 = vadd.f32 %v1012, %v1115
        %v1117 = vpop.f32.mrb[0].mxu0
        %1118 = vmatprep.mubr.bf16.mxu0 0
        %1119 = vmatmul.mubr.bf16.gmra.mrb[0].mxu0 %v986
        %v1120 = vpop.f32.mrb[0].mxu0
        %v1121 = vadd.f32 %v1012, %v1120
        %v1122 = vpop.f32.mrb[0].mxu0
        %v1123 = vpop.f32.mrb[0].mxu0
        %v1124 = vadd.f32 %v1012, %v1123
        %v1125 = vpop.f32.mrb[0].mxu0
        %1126 = vmatprep.mubr.bf16.mxu0 0
        %1127 = vmatmul.mubr.bf16.gmra.mrb[0].mxu0 %v987
        %v1128 = vpop.f32.mrb[0].mxu0
        %v1129 = vadd.f32 %v1012, %v1128
        %v1130 = vpop.f32.mrb[0].mxu0
        %v1131 = vpop.f32.mrb[0].mxu0
        %v1132 = vadd.f32 %v1012, %v1131
        %v1133 = vpop.f32.mrb[0].mxu0
        %1134 = vmatprep.mubr.bf16.mxu0 0
        %1135 = vmatmul.mubr.bf16.gmra.mrb[0].mxu0 %v988
        %v1136 = vpop.f32.mrb[0].mxu0
        %v1137 = vadd.f32 %v1012, %v1136
        %v1138 = vpop.f32.mrb[0].mxu0
        %v1139 = vpop.f32.mrb[0].mxu0
        %v1140 = vadd.f32 %v1012, %v1139
        %v1141 = vpop.f32.mrb[0].mxu0
        %1142 = vmatprep.mubr.bf16.mxu0 0
        %1143 = vmatmul.mubr.bf16.gmra.mrb[0].mxu0 %v989
        %v1144 = vpop.f32.mrb[0].mxu0
        %v1145 = vadd.f32 %v1012, %v1144
        %v1146 = vpop.f32.mrb[0].mxu0
        %v1147 = vpop.f32.mrb[0].mxu0
        %v1148 = vadd.f32 %v1012, %v1147
        %v1149 = vpop.f32.mrb[0].mxu0
        %1150 = vmatprep.mubr.bf16.mxu0 0
        %1151 = vmatmul.mubr.bf16.gmra.mrb[0].mxu0 %v990
        %v1152 = vpop.f32.mrb[0].mxu0
        %v1153 = vadd.f32 %v1012, %v1152
        %v1154 = vpop.f32.mrb[0].mxu0
        %v1155 = vpop.f32.mrb[0].mxu0
        %v1156 = vadd.f32 %v1012, %v1155
        %v1157 = vpop.f32.mrb[0].mxu0
        %1158 = vdwg.mxu0
        %v1159 = vmax.f32 %v1097, 0.0
        %v1160 = vmax.f32 %v1100, 0.0
        %v1161 = vmax.f32 %v1105, 0.0
        %v1162 = vmax.f32 %v1108, 0.0
        %v1163 = vmax.f32 %v1113, 0.0
        %v1164 = vmax.f32 %v1116, 0.0
        %v1165 = vmax.f32 %v1121, 0.0
        %v1166 = vmax.f32 %v1124, 0.0
        %v1167 = vmax.f32 %v1129, 0.0
        %v1168 = vmax.f32 %v1132, 0.0
        %v1169 = vmax.f32 %v1137, 0.0
        %v1170 = vmax.f32 %v1140, 0.0
        %v1171 = vmax.f32 %v1145, 0.0
        %v1172 = vmax.f32 %v1148, 0.0
        %v1173 = vmax.f32 %v1153, 0.0
        %v1174 = vmax.f32 %v1156, 0.0
        %v1175 = vpack.c.bf16 %v1160, %v1159
        %v1176 = vpack.c.bf16 %v1162, %v1161
        %v1177 = vpack.c.bf16 %v1164, %v1163
        %v1178 = vpack.c.bf16 %v1166, %v1165
        %v1179 = vpack.c.bf16 %v1168, %v1167
        %v1180 = vpack.c.bf16 %v1170, %v1169
        %v1181 = vpack.c.bf16 %v1172, %v1171
        %v1182 = vpack.c.bf16 %v1174, %v1173
        %v1183 = vld [vmem:[#allocation8] sm:$0xf]
        %v1184 = vld [vmem:[#allocation8 + $0x4] sm:$0xf]
        %v1185 = vld [vmem:[#allocation8 + $0x8] sm:$0xf]
        %v1186 = vld [vmem:[#allocation8 + $0xc] sm:$0xf]
        %v1187 = vld [vmem:[#allocation8 + $0x10] sm:$0xf]
        %v1188 = vld [vmem:[#allocation8 + $0x14] sm:$0xf]
        %v1189 = vld [vmem:[#allocation8 + $0x18] sm:$0xf]
        %v1190 = vld [vmem:[#allocation8 + $0x1c] sm:$0xf]
        %v1191 = vld [vmem:[#allocation8 + $0x20] sm:$0xf]
        %v1192 = vld [vmem:[#allocation8 + $0x24] sm:$0xf]
        %v1193 = vld [vmem:[#allocation8 + $0x28] sm:$0xf]
        %v1194 = vld [vmem:[#allocation8 + $0x2c] sm:$0xf]
        %v1195 = vld [vmem:[#allocation8 + $0x30] sm:$0xf]
        %v1196 = vld [vmem:[#allocation8 + $0x34] sm:$0xf]
        %v1197 = vld [vmem:[#allocation8 + $0x38] sm:$0xf]
        %v1198 = vld [vmem:[#allocation8 + $0x3c] sm:$0xf]
        %v1199 = vld [vmem:[%s6] sm:$0x1]
        %v1201 = vlaneseq
        %v1202 = vshrl.u32 %v1201, 7
        %v1203 = vsub.s32 0, %v1202
        %v1204 = vrot.slane %v1199, %v1203
        %v1222 = vunpack.c.l.b16 %v1183
        %v1223 = vunpack.c.l.b16 %v1184
        %v1224 = vunpack.c.l.b16 %v1185
        %v1225 = vunpack.c.l.b16 %v1186
        %v1226 = vunpack.c.l.b16 %v1187
        %v1227 = vunpack.c.l.b16 %v1188
        %v1228 = vunpack.c.l.b16 %v1189
        %v1229 = vunpack.c.l.b16 %v1190
        %v1230 = vunpack.c.l.b16 %v1191
        %v1231 = vunpack.c.l.b16 %v1192
        %v1232 = vunpack.c.l.b16 %v1193
        %v1233 = vunpack.c.l.b16 %v1194
        %v1234 = vunpack.c.l.b16 %v1195
        %v1235 = vunpack.c.l.b16 %v1196
        %v1236 = vunpack.c.l.b16 %v1197
        %v1237 = vunpack.c.l.b16 %v1198
        %v1238 = vpack.c.b16 %v1223, %v1222
        %v1239 = vpack.c.b16 %v1225, %v1224
        %v1240 = vpack.c.b16 %v1227, %v1226
        %v1241 = vpack.c.b16 %v1229, %v1228
        %v1242 = vpack.c.b16 %v1231, %v1230
        %v1243 = vpack.c.b16 %v1233, %v1232
        %v1244 = vpack.c.b16 %v1235, %v1234
        %v1245 = vpack.c.b16 %v1237, %v1236
        %1254 = vmatprep.subr.bf16.mxu0 0
        %1255 = vmatpush1.bf16.msra.mxu0 %v1238
        %1256 = vmatprep.subr.bf16.mxu0 0
        %1257 = vmatpush1.bf16.msra.mxu0 %v1239
        %1258 = vmatprep.subr.bf16.mxu0 0
        %1259 = vmatpush1.bf16.msra.mxu0 %v1240
        %1260 = vmatprep.subr.bf16.mxu0 0
        %1261 = vmatpush1.bf16.msra.mxu0 %v1241
        %1262 = vmatprep.subr.bf16.mxu0 0
        %1263 = vmatpush1.bf16.msra.mxu0 %v1242
        %1264 = vmatprep.subr.bf16.mxu0 0
        %1265 = vmatpush1.bf16.msra.mxu0 %v1243
        %1266 = vmatprep.subr.bf16.mxu0 0
        %1267 = vmatpush1.bf16.msra.mxu0 %v1244
        %1268 = vmatprep.subr.bf16.mxu0 0
        %1269 = vmatpush1.bf16.msra.mxu0 %v1245
        %1270 = vmatprep.subr.bf16.mxu0 0
        %1271 = vmatpush1.bf16.msra.mxu0 0
        %1272 = vmatprep.subr.bf16.mxu0 0
        %1273 = vmatpush1.bf16.msra.mxu0 0
        %1274 = vmatprep.subr.bf16.mxu0 0
        %1275 = vmatpush1.bf16.msra.mxu0 0
        %1276 = vmatprep.subr.bf16.mxu0 0
        %1277 = vmatpush1.bf16.msra.mxu0 0
        %1278 = vmatprep.subr.bf16.mxu0 0
        %1279 = vmatpush1.bf16.msra.mxu0 0
        %1280 = vmatprep.subr.bf16.mxu0 0
        %1281 = vmatpush1.bf16.msra.mxu0 0
        %1282 = vmatprep.subr.bf16.mxu0 0
        %1283 = vmatpush1.bf16.msra.mxu0 0
        %1284 = vmatprep.subr.bf16.mxu0 0
        %1285 = vmatpush1.bf16.msra.mxu0 0
        %1286 = vmatprep.mubr.bf16.mxu0 0
        %1287 = vmatmul.mubr.bf16.gmra.mrb[0].mxu0 %v1175
        %v1288 = vpop.f32.mrb[0].mxu0
        %v1289 = vadd.f32 %v1204, %v1288
        %v1290 = vpop.f32.mrb[0].mxu0
        %v1291 = vpop.f32.mrb[0].mxu0
        %v1292 = vadd.f32 %v1204, %v1291
        %v1293 = vpop.f32.mrb[0].mxu0
        %1294 = vmatprep.mubr.bf16.mxu0 0
        %1295 = vmatmul.mubr.bf16.gmra.mrb[0].mxu0 %v1176
        %v1296 = vpop.f32.mrb[0].mxu0
        %v1297 = vadd.f32 %v1204, %v1296
        %v1298 = vpop.f32.mrb[0].mxu0
        %v1299 = vpop.f32.mrb[0].mxu0
        %v1300 = vadd.f32 %v1204, %v1299
        %v1301 = vpop.f32.mrb[0].mxu0
        %1302 = vmatprep.mubr.bf16.mxu0 0
        %1303 = vmatmul.mubr.bf16.gmra.mrb[0].mxu0 %v1177
        %v1304 = vpop.f32.mrb[0].mxu0
        %v1305 = vadd.f32 %v1204, %v1304
        %v1306 = vpop.f32.mrb[0].mxu0
        %v1307 = vpop.f32.mrb[0].mxu0
        %v1308 = vadd.f32 %v1204, %v1307
        %v1309 = vpop.f32.mrb[0].mxu0
        %1310 = vmatprep.mubr.bf16.mxu0 0
        %1311 = vmatmul.mubr.bf16.gmra.mrb[0].mxu0 %v1178
        %v1312 = vpop.f32.mrb[0].mxu0
        %v1313 = vadd.f32 %v1204, %v1312
        %v1314 = vpop.f32.mrb[0].mxu0
        %v1315 = vpop.f32.mrb[0].mxu0
        %v1316 = vadd.f32 %v1204, %v1315
        %v1317 = vpop.f32.mrb[0].mxu0
        %1318 = vmatprep.mubr.bf16.mxu0 0
        %1319 = vmatmul.mubr.bf16.gmra.mrb[0].mxu0 %v1179
        %v1320 = vpop.f32.mrb[0].mxu0
        %v1321 = vadd.f32 %v1204, %v1320
        %v1322 = vpop.f32.mrb[0].mxu0
        %v1323 = vpop.f32.mrb[0].mxu0
        %v1324 = vadd.f32 %v1204, %v1323
        %v1325 = vpop.f32.mrb[0].mxu0
        %1326 = vmatprep.mubr.bf16.mxu0 0
        %1327 = vmatmul.mubr.bf16.gmra.mrb[0].mxu0 %v1180
        %v1328 = vpop.f32.mrb[0].mxu0
        %v1329 = vadd.f32 %v1204, %v1328
        %v1330 = vpop.f32.mrb[0].mxu0
        %v1331 = vpop.f32.mrb[0].mxu0
        %v1332 = vadd.f32 %v1204, %v1331
        %v1333 = vpop.f32.mrb[0].mxu0
        %1334 = vmatprep.mubr.bf16.mxu0 0
        %1335 = vmatmul.mubr.bf16.gmra.mrb[0].mxu0 %v1181
        %v1336 = vpop.f32.mrb[0].mxu0
        %v1337 = vadd.f32 %v1204, %v1336
        %v1338 = vpop.f32.mrb[0].mxu0
        %v1339 = vpop.f32.mrb[0].mxu0
        %v1340 = vadd.f32 %v1204, %v1339
        %v1341 = vpop.f32.mrb[0].mxu0
        %1342 = vmatprep.mubr.bf16.mxu0 0
        %1343 = vmatmul.mubr.bf16.gmra.mrb[0].mxu0 %v1182
        %v1344 = vpop.f32.mrb[0].mxu0
        %v1345 = vadd.f32 %v1204, %v1344
        %v1346 = vpop.f32.mrb[0].mxu0
        %v1347 = vpop.f32.mrb[0].mxu0
        %v1348 = vadd.f32 %v1204, %v1347
        %v1349 = vpop.f32.mrb[0].mxu0
        %1350 = vdwg.mxu0
        %v1351 = vmax.f32 %v1289, 0.0
        %v1352 = vmax.f32 %v1292, 0.0
        %v1353 = vmax.f32 %v1297, 0.0
        %v1354 = vmax.f32 %v1300, 0.0
        %v1355 = vmax.f32 %v1305, 0.0
        %v1356 = vmax.f32 %v1308, 0.0
        %v1357 = vmax.f32 %v1313, 0.0
        %v1358 = vmax.f32 %v1316, 0.0
        %v1359 = vmax.f32 %v1321, 0.0
        %v1360 = vmax.f32 %v1324, 0.0
        %v1361 = vmax.f32 %v1329, 0.0
        %v1362 = vmax.f32 %v1332, 0.0
        %v1363 = vmax.f32 %v1337, 0.0
        %v1364 = vmax.f32 %v1340, 0.0
        %v1365 = vmax.f32 %v1345, 0.0
        %v1366 = vmax.f32 %v1348, 0.0
        %v1367 = vpack.c.bf16 %v1352, %v1351
        %v1368 = vpack.c.bf16 %v1354, %v1353
        %v1369 = vpack.c.bf16 %v1356, %v1355
        %v1370 = vpack.c.bf16 %v1358, %v1357
        %v1371 = vpack.c.bf16 %v1360, %v1359
        %v1372 = vpack.c.bf16 %v1362, %v1361
        %v1373 = vpack.c.bf16 %v1364, %v1363
        %v1374 = vpack.c.bf16 %v1366, %v1365
        %v1375 = vld [vmem:[#allocation10] sm:$0xf]
        %v1376 = vld [vmem:[#allocation10 + $0x4] sm:$0xf]
        %v1377 = vld [vmem:[#allocation10 + $0x8] sm:$0xf]
        %v1378 = vld [vmem:[#allocation10 + $0xc] sm:$0xf]
        %v1379 = vld [vmem:[#allocation10 + $0x10] sm:$0xf]
        %v1380 = vld [vmem:[#allocation10 + $0x14] sm:$0xf]
        %v1381 = vld [vmem:[#allocation10 + $0x18] sm:$0xf]
        %v1382 = vld [vmem:[#allocation10 + $0x1c] sm:$0xf]
        %v1383 = vld [vmem:[#allocation10 + $0x20] sm:$0xf]
        %v1384 = vld [vmem:[#allocation10 + $0x24] sm:$0xf]
        %v1385 = vld [vmem:[#allocation10 + $0x28] sm:$0xf]
        %v1386 = vld [vmem:[#allocation10 + $0x2c] sm:$0xf]
        %v1387 = vld [vmem:[#allocation10 + $0x30] sm:$0xf]
        %v1388 = vld [vmem:[#allocation10 + $0x34] sm:$0xf]
        %v1389 = vld [vmem:[#allocation10 + $0x38] sm:$0xf]
        %v1390 = vld [vmem:[#allocation10 + $0x3c] sm:$0xf]
        %v1391 = vld [vmem:[%s8] sm:$0x1]
        %v1393 = vlaneseq
        %v1394 = vshrl.u32 %v1393, 7
        %v1395 = vsub.s32 0, %v1394
        %v1396 = vrot.slane %v1391, %v1395
        %v1414 = vunpack.c.l.b16 %v1375
        %v1415 = vunpack.c.l.b16 %v1376
        %v1416 = vunpack.c.l.b16 %v1377
        %v1417 = vunpack.c.l.b16 %v1378
        %v1418 = vunpack.c.l.b16 %v1379
        %v1419 = vunpack.c.l.b16 %v1380
        %v1420 = vunpack.c.l.b16 %v1381
        %v1421 = vunpack.c.l.b16 %v1382
        %v1422 = vunpack.c.l.b16 %v1383
        %v1423 = vunpack.c.l.b16 %v1384
        %v1424 = vunpack.c.l.b16 %v1385
        %v1425 = vunpack.c.l.b16 %v1386
        %v1426 = vunpack.c.l.b16 %v1387
        %v1427 = vunpack.c.l.b16 %v1388
        %v1428 = vunpack.c.l.b16 %v1389
        %v1429 = vunpack.c.l.b16 %v1390
        %v1430 = vpack.c.b16 %v1415, %v1414
        %v1431 = vpack.c.b16 %v1417, %v1416
        %v1432 = vpack.c.b16 %v1419, %v1418
        %v1433 = vpack.c.b16 %v1421, %v1420
        %v1434 = vpack.c.b16 %v1423, %v1422
        %v1435 = vpack.c.b16 %v1425, %v1424
        %v1436 = vpack.c.b16 %v1427, %v1426
        %v1437 = vpack.c.b16 %v1429, %v1428
        %1446 = vmatprep.subr.bf16.mxu0 0
        %1447 = vmatpush1.bf16.msra.mxu0 %v1430
        %1448 = vmatprep.subr.bf16.mxu0 0
        %1449 = vmatpush1.bf16.msra.mxu0 %v1431
        %1450 = vmatprep.subr.bf16.mxu0 0
        %1451 = vmatpush1.bf16.msra.mxu0 %v1432
        %1452 = vmatprep.subr.bf16.mxu0 0
        %1453 = vmatpush1.bf16.msra.mxu0 %v1433
        %1454 = vmatprep.subr.bf16.mxu0 0
        %1455 = vmatpush1.bf16.msra.mxu0 %v1434
        %1456 = vmatprep.subr.bf16.mxu0 0
        %1457 = vmatpush1.bf16.msra.mxu0 %v1435
        %1458 = vmatprep.subr.bf16.mxu0 0
        %1459 = vmatpush1.bf16.msra.mxu0 %v1436
        %1460 = vmatprep.subr.bf16.mxu0 0
        %1461 = vmatpush1.bf16.msra.mxu0 %v1437
        %1462 = vmatprep.subr.bf16.mxu0 0
        %1463 = vmatpush1.bf16.msra.mxu0 0
        %1464 = vmatprep.subr.bf16.mxu0 0
        %1465 = vmatpush1.bf16.msra.mxu0 0
        %1466 = vmatprep.subr.bf16.mxu0 0
        %1467 = vmatpush1.bf16.msra.mxu0 0
        %1468 = vmatprep.subr.bf16.mxu0 0
        %1469 = vmatpush1.bf16.msra.mxu0 0
        %1470 = vmatprep.subr.bf16.mxu0 0
        %1471 = vmatpush1.bf16.msra.mxu0 0
        %1472 = vmatprep.subr.bf16.mxu0 0
        %1473 = vmatpush1.bf16.msra.mxu0 0
        %1474 = vmatprep.subr.bf16.mxu0 0
        %1475 = vmatpush1.bf16.msra.mxu0 0
        %1476 = vmatprep.subr.bf16.mxu0 0
        %1477 = vmatpush1.bf16.msra.mxu0 0
        %1478 = vmatprep.mubr.bf16.mxu0 0
        %1479 = vmatmul.mubr.bf16.gmra.mrb[0].mxu0 %v1367
        %v1480 = vpop.f32.mrb[0].mxu0
        %v1481 = vadd.f32 %v1396, %v1480
        %v1482 = vpop.f32.mrb[0].mxu0
        %v1483 = vpop.f32.mrb[0].mxu0
        %v1484 = vadd.f32 %v1396, %v1483
        %v1485 = vpop.f32.mrb[0].mxu0
        %1486 = vmatprep.mubr.bf16.mxu0 0
        %1487 = vmatmul.mubr.bf16.gmra.mrb[0].mxu0 %v1368
        %v1488 = vpop.f32.mrb[0].mxu0
        %v1489 = vadd.f32 %v1396, %v1488
        %v1490 = vpop.f32.mrb[0].mxu0
        %v1491 = vpop.f32.mrb[0].mxu0
        %v1492 = vadd.f32 %v1396, %v1491
        %v1493 = vpop.f32.mrb[0].mxu0
        %1494 = vmatprep.mubr.bf16.mxu0 0
        %1495 = vmatmul.mubr.bf16.gmra.mrb[0].mxu0 %v1369
        %v1496 = vpop.f32.mrb[0].mxu0
        %v1497 = vadd.f32 %v1396, %v1496
        %v1498 = vpop.f32.mrb[0].mxu0
        %v1499 = vpop.f32.mrb[0].mxu0
        %v1500 = vadd.f32 %v1396, %v1499
        %v1501 = vpop.f32.mrb[0].mxu0
        %1502 = vmatprep.mubr.bf16.mxu0 0
        %1503 = vmatmul.mubr.bf16.gmra.mrb[0].mxu0 %v1370
        %v1504 = vpop.f32.mrb[0].mxu0
        %v1505 = vadd.f32 %v1396, %v1504
        %v1506 = vpop.f32.mrb[0].mxu0
        %v1507 = vpop.f32.mrb[0].mxu0
        %v1508 = vadd.f32 %v1396, %v1507
        %v1509 = vpop.f32.mrb[0].mxu0
        %1510 = vmatprep.mubr.bf16.mxu0 0
        %1511 = vmatmul.mubr.bf16.gmra.mrb[0].mxu0 %v1371
        %v1512 = vpop.f32.mrb[0].mxu0
        %v1513 = vadd.f32 %v1396, %v1512
        %v1514 = vpop.f32.mrb[0].mxu0
        %v1515 = vpop.f32.mrb[0].mxu0
        %v1516 = vadd.f32 %v1396, %v1515
        %v1517 = vpop.f32.mrb[0].mxu0
        %1518 = vmatprep.mubr.bf16.mxu0 0
        %1519 = vmatmul.mubr.bf16.gmra.mrb[0].mxu0 %v1372
        %v1520 = vpop.f32.mrb[0].mxu0
        %v1521 = vadd.f32 %v1396, %v1520
        %v1522 = vpop.f32.mrb[0].mxu0
        %v1523 = vpop.f32.mrb[0].mxu0
        %v1524 = vadd.f32 %v1396, %v1523
        %v1525 = vpop.f32.mrb[0].mxu0
        %1526 = vmatprep.mubr.bf16.mxu0 0
        %1527 = vmatmul.mubr.bf16.gmra.mrb[0].mxu0 %v1373
        %v1528 = vpop.f32.mrb[0].mxu0
        %v1529 = vadd.f32 %v1396, %v1528
        %v1530 = vpop.f32.mrb[0].mxu0
        %v1531 = vpop.f32.mrb[0].mxu0
        %v1532 = vadd.f32 %v1396, %v1531
        %v1533 = vpop.f32.mrb[0].mxu0
        %1534 = vmatprep.mubr.bf16.mxu0 0
        %1535 = vmatmul.mubr.bf16.gmra.mrb[0].mxu0 %v1374
        %v1536 = vpop.f32.mrb[0].mxu0
        %v1537 = vadd.f32 %v1396, %v1536
        %v1538 = vpop.f32.mrb[0].mxu0
        %v1539 = vpop.f32.mrb[0].mxu0
        %v1540 = vadd.f32 %v1396, %v1539
        %v1541 = vpop.f32.mrb[0].mxu0
        %1542 = vdwg.mxu0
        %v1543 = vpack.c.bf16 %v1484, %v1481
        %v1544 = vpack.c.bf16 %v1492, %v1489
        %v1545 = vpack.c.bf16 %v1500, %v1497
        %v1546 = vpack.c.bf16 %v1508, %v1505
        %v1547 = vpack.c.bf16 %v1516, %v1513
        %v1548 = vpack.c.bf16 %v1524, %v1521
        %v1549 = vpack.c.bf16 %v1532, %v1529
        %v1550 = vpack.c.bf16 %v1540, %v1537
        %v1551 = vld [vmem:[#allocation11] sm:$0xf]
        %v1552 = vld [vmem:[#allocation11 + $0x4] sm:$0xf]
        %v1553 = vld [vmem:[#allocation11 + $0x8] sm:$0xf]
        %v1554 = vld [vmem:[#allocation11 + $0xc] sm:$0xf]
        %v1555 = vld [vmem:[#allocation11 + $0x10] sm:$0xf]
        %v1556 = vld [vmem:[#allocation11 + $0x14] sm:$0xf]
        %v1557 = vld [vmem:[#allocation11 + $0x18] sm:$0xf]
        %v1558 = vld [vmem:[#allocation11 + $0x1c] sm:$0xf]
        %v1559 = vld [vmem:[#allocation11 + $0x20] sm:$0xf]
        %v1560 = vld [vmem:[#allocation11 + $0x24] sm:$0xf]
        %v1561 = vld [vmem:[#allocation11 + $0x28] sm:$0xf]
        %v1562 = vld [vmem:[#allocation11 + $0x2c] sm:$0xf]
        %v1563 = vld [vmem:[#allocation11 + $0x30] sm:$0xf]
        %v1564 = vld [vmem:[#allocation11 + $0x34] sm:$0xf]
        %v1565 = vld [vmem:[#allocation11 + $0x38] sm:$0xf]
        %v1566 = vld [vmem:[#allocation11 + $0x3c] sm:$0xf]
        %v1567 = vld [vmem:[%s10] sm:$0x1]
        %v1569 = vlaneseq
        %v1570 = vshrl.u32 %v1569, 7
        %v1571 = vsub.s32 0, %v1570
        %v1572 = vrot.slane %v1567, %v1571
        %v1590 = vunpack.c.l.b16 %v1551
        %v1591 = vunpack.c.l.b16 %v1552
        %v1592 = vunpack.c.l.b16 %v1553
        %v1593 = vunpack.c.l.b16 %v1554
        %v1594 = vunpack.c.l.b16 %v1555
        %v1595 = vunpack.c.l.b16 %v1556
        %v1596 = vunpack.c.l.b16 %v1557
        %v1597 = vunpack.c.l.b16 %v1558
        %v1598 = vunpack.c.l.b16 %v1559
        %v1599 = vunpack.c.l.b16 %v1560
        %v1600 = vunpack.c.l.b16 %v1561
        %v1601 = vunpack.c.l.b16 %v1562
        %v1602 = vunpack.c.l.b16 %v1563
        %v1603 = vunpack.c.l.b16 %v1564
        %v1604 = vunpack.c.l.b16 %v1565
        %v1605 = vunpack.c.l.b16 %v1566
        %v1606 = vpack.c.b16 %v1591, %v1590
        %v1607 = vpack.c.b16 %v1593, %v1592
        %v1608 = vpack.c.b16 %v1595, %v1594
        %v1609 = vpack.c.b16 %v1597, %v1596
        %v1610 = vpack.c.b16 %v1599, %v1598
        %v1611 = vpack.c.b16 %v1601, %v1600
        %v1612 = vpack.c.b16 %v1603, %v1602
        %v1613 = vpack.c.b16 %v1605, %v1604
        %1622 = vmatprep.subr.bf16.mxu0 0
        %1623 = vmatpush1.bf16.msra.mxu0 %v1606
        %1624 = vmatprep.subr.bf16.mxu0 0
        %1625 = vmatpush1.bf16.msra.mxu0 %v1607
        %1626 = vmatprep.subr.bf16.mxu0 0
        %1627 = vmatpush1.bf16.msra.mxu0 %v1608
        %1628 = vmatprep.subr.bf16.mxu0 0
        %1629 = vmatpush1.bf16.msra.mxu0 %v1609
        %1630 = vmatprep.subr.bf16.mxu0 0
        %1631 = vmatpush1.bf16.msra.mxu0 %v1610
        %1632 = vmatprep.subr.bf16.mxu0 0
        %1633 = vmatpush1.bf16.msra.mxu0 %v1611
        %1634 = vmatprep.subr.bf16.mxu0 0
        %1635 = vmatpush1.bf16.msra.mxu0 %v1612
        %1636 = vmatprep.subr.bf16.mxu0 0
        %1637 = vmatpush1.bf16.msra.mxu0 %v1613
        %1638 = vmatprep.subr.bf16.mxu0 0
        %1639 = vmatpush1.bf16.msra.mxu0 0
        %1640 = vmatprep.subr.bf16.mxu0 0
        %1641 = vmatpush1.bf16.msra.mxu0 0
        %1642 = vmatprep.subr.bf16.mxu0 0
        %1643 = vmatpush1.bf16.msra.mxu0 0
        %1644 = vmatprep.subr.bf16.mxu0 0
        %1645 = vmatpush1.bf16.msra.mxu0 0
        %1646 = vmatprep.subr.bf16.mxu0 0
        %1647 = vmatpush1.bf16.msra.mxu0 0
        %1648 = vmatprep.subr.bf16.mxu0 0
        %1649 = vmatpush1.bf16.msra.mxu0 0
        %1650 = vmatprep.subr.bf16.mxu0 0
        %1651 = vmatpush1.bf16.msra.mxu0 0
        %1652 = vmatprep.subr.bf16.mxu0 0
        %1653 = vmatpush1.bf16.msra.mxu0 0
        %1654 = vmatprep.mubr.bf16.mxu0 0
        %1655 = vmatmul.mubr.bf16.gmra.mrb[0].mxu0 %v1543
        %v1656 = vpop.f32.mrb[0].mxu0
        %v1657 = vadd.f32 %v1572, %v1656
        %v1658 = vpop.f32.mrb[0].mxu0
        %v1659 = vpop.f32.mrb[0].mxu0
        %v1660 = vadd.f32 %v1572, %v1659
        %v1661 = vpop.f32.mrb[0].mxu0
        %1662 = vmatprep.mubr.bf16.mxu0 0
        %1663 = vmatmul.mubr.bf16.gmra.mrb[0].mxu0 %v1544
        %v1664 = vpop.f32.mrb[0].mxu0
        %v1665 = vadd.f32 %v1572, %v1664
        %v1666 = vpop.f32.mrb[0].mxu0
        %v1667 = vpop.f32.mrb[0].mxu0
        %v1668 = vadd.f32 %v1572, %v1667
        %v1669 = vpop.f32.mrb[0].mxu0
        %1670 = vmatprep.mubr.bf16.mxu0 0
        %1671 = vmatmul.mubr.bf16.gmra.mrb[0].mxu0 %v1545
        %v1672 = vpop.f32.mrb[0].mxu0
        %v1673 = vadd.f32 %v1572, %v1672
        %v1674 = vpop.f32.mrb[0].mxu0
        %v1675 = vpop.f32.mrb[0].mxu0
        %v1676 = vadd.f32 %v1572, %v1675
        %v1677 = vpop.f32.mrb[0].mxu0
        %1678 = vmatprep.mubr.bf16.mxu0 0
        %1679 = vmatmul.mubr.bf16.gmra.mrb[0].mxu0 %v1546
        %v1680 = vpop.f32.mrb[0].mxu0
        %v1681 = vadd.f32 %v1572, %v1680
        %v1682 = vpop.f32.mrb[0].mxu0
        %v1683 = vpop.f32.mrb[0].mxu0
        %v1684 = vadd.f32 %v1572, %v1683
        %v1685 = vpop.f32.mrb[0].mxu0
        %1686 = vmatprep.mubr.bf16.mxu0 0
        %1687 = vmatmul.mubr.bf16.gmra.mrb[0].mxu0 %v1547
        %v1688 = vpop.f32.mrb[0].mxu0
        %v1689 = vadd.f32 %v1572, %v1688
        %v1690 = vpop.f32.mrb[0].mxu0
        %v1691 = vpop.f32.mrb[0].mxu0
        %v1692 = vadd.f32 %v1572, %v1691
        %v1693 = vpop.f32.mrb[0].mxu0
        %1694 = vmatprep.mubr.bf16.mxu0 0
        %1695 = vmatmul.mubr.bf16.gmra.mrb[0].mxu0 %v1548
        %v1696 = vpop.f32.mrb[0].mxu0
        %v1697 = vadd.f32 %v1572, %v1696
        %v1698 = vpop.f32.mrb[0].mxu0
        %v1699 = vpop.f32.mrb[0].mxu0
        %v1700 = vadd.f32 %v1572, %v1699
        %v1701 = vpop.f32.mrb[0].mxu0
        %1702 = vmatprep.mubr.bf16.mxu0 0
        %1703 = vmatmul.mubr.bf16.gmra.mrb[0].mxu0 %v1549
        %v1704 = vpop.f32.mrb[0].mxu0
        %v1705 = vadd.f32 %v1572, %v1704
        %v1706 = vpop.f32.mrb[0].mxu0
        %v1707 = vpop.f32.mrb[0].mxu0
        %v1708 = vadd.f32 %v1572, %v1707
        %v1709 = vpop.f32.mrb[0].mxu0
        %1710 = vmatprep.mubr.bf16.mxu0 0
        %1711 = vmatmul.mubr.bf16.gmra.mrb[0].mxu0 %v1550
        %v1712 = vpop.f32.mrb[0].mxu0
        %v1713 = vadd.f32 %v1572, %v1712
        %v1714 = vpop.f32.mrb[0].mxu0
        %v1715 = vpop.f32.mrb[0].mxu0
        %v1716 = vadd.f32 %v1572, %v1715
        %v1717 = vpop.f32.mrb[0].mxu0
        %1718 = vdwg.mxu0
        %v1719 = vmax.f32 %v1657, 0.0
        %v1720 = vmax.f32 %v1660, 0.0
        %v1721 = vmax.f32 %v1665, 0.0
        %v1722 = vmax.f32 %v1668, 0.0
        %v1723 = vmax.f32 %v1673, 0.0
        %v1724 = vmax.f32 %v1676, 0.0
        %v1725 = vmax.f32 %v1681, 0.0
        %v1726 = vmax.f32 %v1684, 0.0
        %v1727 = vmax.f32 %v1689, 0.0
        %v1728 = vmax.f32 %v1692, 0.0
        %v1729 = vmax.f32 %v1697, 0.0
        %v1730 = vmax.f32 %v1700, 0.0
        %v1731 = vmax.f32 %v1705, 0.0
        %v1732 = vmax.f32 %v1708, 0.0
        %v1733 = vmax.f32 %v1713, 0.0
        %v1734 = vmax.f32 %v1716, 0.0
        %v1735 = vpack.c.bf16 %v1720, %v1719
        %v1736 = vpack.c.bf16 %v1722, %v1721
        %v1737 = vpack.c.bf16 %v1724, %v1723
        %v1738 = vpack.c.bf16 %v1726, %v1725
        %v1739 = vpack.c.bf16 %v1728, %v1727
        %v1740 = vpack.c.bf16 %v1730, %v1729
        %v1741 = vpack.c.bf16 %v1732, %v1731
        %v1742 = vpack.c.bf16 %v1734, %v1733
        %v1743 = vld [vmem:[#allocation13] sm:$0xf]
        %v1744 = vld [vmem:[#allocation13 + $0x4] sm:$0xf]
        %v1745 = vld [vmem:[#allocation13 + $0x8] sm:$0xf]
        %v1746 = vld [vmem:[#allocation13 + $0xc] sm:$0xf]
        %v1747 = vld [vmem:[#allocation13 + $0x10] sm:$0xf]
        %v1748 = vld [vmem:[#allocation13 + $0x14] sm:$0xf]
        %v1749 = vld [vmem:[#allocation13 + $0x18] sm:$0xf]
        %v1750 = vld [vmem:[#allocation13 + $0x1c] sm:$0xf]
        %v1751 = vld [vmem:[#allocation13 + $0x20] sm:$0xf]
        %v1752 = vld [vmem:[#allocation13 + $0x24] sm:$0xf]
        %v1753 = vld [vmem:[#allocation13 + $0x28] sm:$0xf]
        %v1754 = vld [vmem:[#allocation13 + $0x2c] sm:$0xf]
        %v1755 = vld [vmem:[#allocation13 + $0x30] sm:$0xf]
        %v1756 = vld [vmem:[#allocation13 + $0x34] sm:$0xf]
        %v1757 = vld [vmem:[#allocation13 + $0x38] sm:$0xf]
        %v1758 = vld [vmem:[#allocation13 + $0x3c] sm:$0xf]
        %v1759 = vld [vmem:[%s12] sm:$0x1]
        %v1761 = vlaneseq
        %v1762 = vshrl.u32 %v1761, 7
        %v1763 = vsub.s32 0, %v1762
        %v1764 = vrot.slane %v1759, %v1763
        %v1782 = vunpack.c.l.b16 %v1743
        %v1783 = vunpack.c.l.b16 %v1744
        %v1784 = vunpack.c.l.b16 %v1745
        %v1785 = vunpack.c.l.b16 %v1746
        %v1786 = vunpack.c.l.b16 %v1747
        %v1787 = vunpack.c.l.b16 %v1748
        %v1788 = vunpack.c.l.b16 %v1749
        %v1789 = vunpack.c.l.b16 %v1750
        %v1790 = vunpack.c.l.b16 %v1751
        %v1791 = vunpack.c.l.b16 %v1752
        %v1792 = vunpack.c.l.b16 %v1753
        %v1793 = vunpack.c.l.b16 %v1754
        %v1794 = vunpack.c.l.b16 %v1755
        %v1795 = vunpack.c.l.b16 %v1756
        %v1796 = vunpack.c.l.b16 %v1757
        %v1797 = vunpack.c.l.b16 %v1758
        %v1798 = vpack.c.b16 %v1783, %v1782
        %v1799 = vpack.c.b16 %v1785, %v1784
        %v1800 = vpack.c.b16 %v1787, %v1786
        %v1801 = vpack.c.b16 %v1789, %v1788
        %v1802 = vpack.c.b16 %v1791, %v1790
        %v1803 = vpack.c.b16 %v1793, %v1792
        %v1804 = vpack.c.b16 %v1795, %v1794
        %v1805 = vpack.c.b16 %v1797, %v1796
        %1814 = vmatprep.subr.bf16.mxu0 0
        %1815 = vmatpush1.bf16.msra.mxu0 %v1798
        %1816 = vmatprep.subr.bf16.mxu0 0
        %1817 = vmatpush1.bf16.msra.mxu0 %v1799
        %1818 = vmatprep.subr.bf16.mxu0 0
        %1819 = vmatpush1.bf16.msra.mxu0 %v1800
        %1820 = vmatprep.subr.bf16.mxu0 0
        %1821 = vmatpush1.bf16.msra.mxu0 %v1801
        %1822 = vmatprep.subr.bf16.mxu0 0
        %1823 = vmatpush1.bf16.msra.mxu0 %v1802
        %1824 = vmatprep.subr.bf16.mxu0 0
        %1825 = vmatpush1.bf16.msra.mxu0 %v1803
        %1826 = vmatprep.subr.bf16.mxu0 0
        %1827 = vmatpush1.bf16.msra.mxu0 %v1804
        %1828 = vmatprep.subr.bf16.mxu0 0
        %1829 = vmatpush1.bf16.msra.mxu0 %v1805
        %1830 = vmatprep.subr.bf16.mxu0 0
        %1831 = vmatpush1.bf16.msra.mxu0 0
        %1832 = vmatprep.subr.bf16.mxu0 0
        %1833 = vmatpush1.bf16.msra.mxu0 0
        %1834 = vmatprep.subr.bf16.mxu0 0
        %1835 = vmatpush1.bf16.msra.mxu0 0
        %1836 = vmatprep.subr.bf16.mxu0 0
        %1837 = vmatpush1.bf16.msra.mxu0 0
        %1838 = vmatprep.subr.bf16.mxu0 0
        %1839 = vmatpush1.bf16.msra.mxu0 0
        %1840 = vmatprep.subr.bf16.mxu0 0
        %1841 = vmatpush1.bf16.msra.mxu0 0
        %1842 = vmatprep.subr.bf16.mxu0 0
        %1843 = vmatpush1.bf16.msra.mxu0 0
        %1844 = vmatprep.subr.bf16.mxu0 0
        %1845 = vmatpush1.bf16.msra.mxu0 0
        %1846 = vmatprep.mubr.bf16.mxu0 0
        %1847 = vmatmul.mubr.bf16.gmra.mrb[0].mxu0 %v1735
        %v1848 = vpop.f32.mrb[0].mxu0
        %v1849 = vadd.f32 %v1764, %v1848
        %v1850 = vpop.f32.mrb[0].mxu0
        %v1851 = vpop.f32.mrb[0].mxu0
        %v1852 = vadd.f32 %v1764, %v1851
        %v1853 = vpop.f32.mrb[0].mxu0
        %1854 = vmatprep.mubr.bf16.mxu0 0
        %1855 = vmatmul.mubr.bf16.gmra.mrb[0].mxu0 %v1736
        %v1856 = vpop.f32.mrb[0].mxu0
        %v1857 = vadd.f32 %v1764, %v1856
        %v1858 = vpop.f32.mrb[0].mxu0
        %v1859 = vpop.f32.mrb[0].mxu0
        %v1860 = vadd.f32 %v1764, %v1859
        %v1861 = vpop.f32.mrb[0].mxu0
        %1862 = vmatprep.mubr.bf16.mxu0 0
        %1863 = vmatmul.mubr.bf16.gmra.mrb[0].mxu0 %v1737
        %v1864 = vpop.f32.mrb[0].mxu0
        %v1865 = vadd.f32 %v1764, %v1864
        %v1866 = vpop.f32.mrb[0].mxu0
        %v1867 = vpop.f32.mrb[0].mxu0
        %v1868 = vadd.f32 %v1764, %v1867
        %v1869 = vpop.f32.mrb[0].mxu0
        %1870 = vmatprep.mubr.bf16.mxu0 0
        %1871 = vmatmul.mubr.bf16.gmra.mrb[0].mxu0 %v1738
        %v1872 = vpop.f32.mrb[0].mxu0
        %v1873 = vadd.f32 %v1764, %v1872
        %v1874 = vpop.f32.mrb[0].mxu0
        %v1875 = vpop.f32.mrb[0].mxu0
        %v1876 = vadd.f32 %v1764, %v1875
        %v1877 = vpop.f32.mrb[0].mxu0
        %1878 = vmatprep.mubr.bf16.mxu0 0
        %1879 = vmatmul.mubr.bf16.gmra.mrb[0].mxu0 %v1739
        %v1880 = vpop.f32.mrb[0].mxu0
        %v1881 = vadd.f32 %v1764, %v1880
        %v1882 = vpop.f32.mrb[0].mxu0
        %v1883 = vpop.f32.mrb[0].mxu0
        %v1884 = vadd.f32 %v1764, %v1883
        %v1885 = vpop.f32.mrb[0].mxu0
        %1886 = vmatprep.mubr.bf16.mxu0 0
        %1887 = vmatmul.mubr.bf16.gmra.mrb[0].mxu0 %v1740
        %v1888 = vpop.f32.mrb[0].mxu0
        %v1889 = vadd.f32 %v1764, %v1888
        %v1890 = vpop.f32.mrb[0].mxu0
        %v1891 = vpop.f32.mrb[0].mxu0
        %v1892 = vadd.f32 %v1764, %v1891
        %v1893 = vpop.f32.mrb[0].mxu0
        %1894 = vmatprep.mubr.bf16.mxu0 0
        %1895 = vmatmul.mubr.bf16.gmra.mrb[0].mxu0 %v1741
        %v1896 = vpop.f32.mrb[0].mxu0
        %v1897 = vadd.f32 %v1764, %v1896
        %v1898 = vpop.f32.mrb[0].mxu0
        %v1899 = vpop.f32.mrb[0].mxu0
        %v1900 = vadd.f32 %v1764, %v1899
        %v1901 = vpop.f32.mrb[0].mxu0
        %1902 = vmatprep.mubr.bf16.mxu0 0
        %1903 = vmatmul.mubr.bf16.gmra.mrb[0].mxu0 %v1742
        %v1904 = vpop.f32.mrb[0].mxu0
        %v1905 = vadd.f32 %v1764, %v1904
        %v1906 = vpop.f32.mrb[0].mxu0
        %v1907 = vpop.f32.mrb[0].mxu0
        %v1908 = vadd.f32 %v1764, %v1907
        %v1909 = vpop.f32.mrb[0].mxu0
        %1910 = vdwg.mxu0
        %v1911 = vmax.f32 %v1849, 0.0
        %v1912 = vmax.f32 %v1852, 0.0
        %v1913 = vmax.f32 %v1857, 0.0
        %v1914 = vmax.f32 %v1860, 0.0
        %v1915 = vmax.f32 %v1865, 0.0
        %v1916 = vmax.f32 %v1868, 0.0
        %v1917 = vmax.f32 %v1873, 0.0
        %v1918 = vmax.f32 %v1876, 0.0
        %v1919 = vmax.f32 %v1881, 0.0
        %v1920 = vmax.f32 %v1884, 0.0
        %v1921 = vmax.f32 %v1889, 0.0
        %v1922 = vmax.f32 %v1892, 0.0
        %v1923 = vmax.f32 %v1897, 0.0
        %v1924 = vmax.f32 %v1900, 0.0
        %v1925 = vmax.f32 %v1905, 0.0
        %v1926 = vmax.f32 %v1908, 0.0
        %v1927 = vpack.c.bf16 %v1912, %v1911
        %v1928 = vpack.c.bf16 %v1914, %v1913
        %v1929 = vpack.c.bf16 %v1916, %v1915
        %v1930 = vpack.c.bf16 %v1918, %v1917
        %v1931 = vpack.c.bf16 %v1920, %v1919
        %v1932 = vpack.c.bf16 %v1922, %v1921
        %v1933 = vpack.c.bf16 %v1924, %v1923
        %v1934 = vpack.c.bf16 %v1926, %v1925
        %v1935 = vld [vmem:[#allocation14] sm:$0xf]
        %v1936 = vld [vmem:[#allocation14 + $0x4] sm:$0xf]
        %v1937 = vld [vmem:[#allocation14 + $0x8] sm:$0xf]
        %v1938 = vld [vmem:[#allocation14 + $0xc] sm:$0xf]
        %v1939 = vld [vmem:[#allocation14 + $0x10] sm:$0xf]
        %v1940 = vld [vmem:[#allocation14 + $0x14] sm:$0xf]
        %v1941 = vld [vmem:[#allocation14 + $0x18] sm:$0xf]
        %v1942 = vld [vmem:[#allocation14 + $0x1c] sm:$0xf]
        %v1943 = vld [vmem:[#allocation14 + $0x20] sm:$0xf]
        %v1944 = vld [vmem:[#allocation14 + $0x24] sm:$0xf]
        %v1945 = vld [vmem:[#allocation14 + $0x28] sm:$0xf]
        %v1946 = vld [vmem:[#allocation14 + $0x2c] sm:$0xf]
        %v1947 = vld [vmem:[#allocation14 + $0x30] sm:$0xf]
        %v1948 = vld [vmem:[#allocation14 + $0x34] sm:$0xf]
        %v1949 = vld [vmem:[#allocation14 + $0x38] sm:$0xf]
        %v1950 = vld [vmem:[#allocation14 + $0x3c] sm:$0xf]
        %v1951 = vld [vmem:[%s14] sm:$0x1]
        %v1953 = vlaneseq
        %v1954 = vshrl.u32 %v1953, 7
        %v1955 = vsub.s32 0, %v1954
        %v1956 = vrot.slane %v1951, %v1955
        %v1974 = vunpack.c.l.b16 %v1935
        %v1975 = vunpack.c.l.b16 %v1936
        %v1976 = vunpack.c.l.b16 %v1937
        %v1977 = vunpack.c.l.b16 %v1938
        %v1978 = vunpack.c.l.b16 %v1939
        %v1979 = vunpack.c.l.b16 %v1940
        %v1980 = vunpack.c.l.b16 %v1941
        %v1981 = vunpack.c.l.b16 %v1942
        %v1982 = vunpack.c.l.b16 %v1943
        %v1983 = vunpack.c.l.b16 %v1944
        %v1984 = vunpack.c.l.b16 %v1945
        %v1985 = vunpack.c.l.b16 %v1946
        %v1986 = vunpack.c.l.b16 %v1947
        %v1987 = vunpack.c.l.b16 %v1948
        %v1988 = vunpack.c.l.b16 %v1949
        %v1989 = vunpack.c.l.b16 %v1950
        %v1990 = vpack.c.b16 %v1975, %v1974
        %v1991 = vpack.c.b16 %v1977, %v1976
        %v1992 = vpack.c.b16 %v1979, %v1978
        %v1993 = vpack.c.b16 %v1981, %v1980
        %v1994 = vpack.c.b16 %v1983, %v1982
        %v1995 = vpack.c.b16 %v1985, %v1984
        %v1996 = vpack.c.b16 %v1987, %v1986
        %v1997 = vpack.c.b16 %v1989, %v1988
        %2006 = vmatprep.subr.bf16.mxu0 0
        %2007 = vmatpush1.bf16.msra.mxu0 %v1990
        %2008 = vmatprep.subr.bf16.mxu0 0
        %2009 = vmatpush1.bf16.msra.mxu0 %v1991
        %2010 = vmatprep.subr.bf16.mxu0 0
        %2011 = vmatpush1.bf16.msra.mxu0 %v1992
        %2012 = vmatprep.subr.bf16.mxu0 0
        %2013 = vmatpush1.bf16.msra.mxu0 %v1993
        %2014 = vmatprep.subr.bf16.mxu0 0
        %2015 = vmatpush1.bf16.msra.mxu0 %v1994
        %2016 = vmatprep.subr.bf16.mxu0 0
        %2017 = vmatpush1.bf16.msra.mxu0 %v1995
        %2018 = vmatprep.subr.bf16.mxu0 0
        %2019 = vmatpush1.bf16.msra.mxu0 %v1996
        %2020 = vmatprep.subr.bf16.mxu0 0
        %2021 = vmatpush1.bf16.msra.mxu0 %v1997
        %2022 = vmatprep.subr.bf16.mxu0 0
        %2023 = vmatpush1.bf16.msra.mxu0 0
        %2024 = vmatprep.subr.bf16.mxu0 0
        %2025 = vmatpush1.bf16.msra.mxu0 0
        %2026 = vmatprep.subr.bf16.mxu0 0
        %2027 = vmatpush1.bf16.msra.mxu0 0
        %2028 = vmatprep.subr.bf16.mxu0 0
        %2029 = vmatpush1.bf16.msra.mxu0 0
        %2030 = vmatprep.subr.bf16.mxu0 0
        %2031 = vmatpush1.bf16.msra.mxu0 0
        %2032 = vmatprep.subr.bf16.mxu0 0
        %2033 = vmatpush1.bf16.msra.mxu0 0
        %2034 = vmatprep.subr.bf16.mxu0 0
        %2035 = vmatpush1.bf16.msra.mxu0 0
        %2036 = vmatprep.subr.bf16.mxu0 0
        %2037 = vmatpush1.bf16.msra.mxu0 0
        %2038 = vmatprep.mubr.bf16.mxu0 0
        %2039 = vmatmul.mubr.bf16.gmra.mrb[0].mxu0 %v1927
        %v2040 = vpop.f32.mrb[0].mxu0
        %v2041 = vadd.f32 %v1956, %v2040
        %v2042 = vpop.f32.mrb[0].mxu0
        %v2043 = vpop.f32.mrb[0].mxu0
        %v2044 = vadd.f32 %v1956, %v2043
        %v2045 = vpop.f32.mrb[0].mxu0
        %2046 = vmatprep.mubr.bf16.mxu0 0
        %2047 = vmatmul.mubr.bf16.gmra.mrb[0].mxu0 %v1928
        %v2048 = vpop.f32.mrb[0].mxu0
        %v2049 = vadd.f32 %v1956, %v2048
        %v2050 = vpop.f32.mrb[0].mxu0
        %v2051 = vpop.f32.mrb[0].mxu0
        %v2052 = vadd.f32 %v1956, %v2051
        %v2053 = vpop.f32.mrb[0].mxu0
        %2054 = vmatprep.mubr.bf16.mxu0 0
        %2055 = vmatmul.mubr.bf16.gmra.mrb[0].mxu0 %v1929
        %v2056 = vpop.f32.mrb[0].mxu0
        %v2057 = vadd.f32 %v1956, %v2056
        %v2058 = vpop.f32.mrb[0].mxu0
        %v2059 = vpop.f32.mrb[0].mxu0
        %v2060 = vadd.f32 %v1956, %v2059
        %v2061 = vpop.f32.mrb[0].mxu0
        %2062 = vmatprep.mubr.bf16.mxu0 0
        %2063 = vmatmul.mubr.bf16.gmra.mrb[0].mxu0 %v1930
        %v2064 = vpop.f32.mrb[0].mxu0
        %v2065 = vadd.f32 %v1956, %v2064
        %v2066 = vpop.f32.mrb[0].mxu0
        %v2067 = vpop.f32.mrb[0].mxu0
        %v2068 = vadd.f32 %v1956, %v2067
        %v2069 = vpop.f32.mrb[0].mxu0
        %2070 = vmatprep.mubr.bf16.mxu0 0
        %2071 = vmatmul.mubr.bf16.gmra.mrb[0].mxu0 %v1931
        %v2072 = vpop.f32.mrb[0].mxu0
        %v2073 = vadd.f32 %v1956, %v2072
        %v2074 = vpop.f32.mrb[0].mxu0
        %v2075 = vpop.f32.mrb[0].mxu0
        %v2076 = vadd.f32 %v1956, %v2075
        %v2077 = vpop.f32.mrb[0].mxu0
        %2078 = vmatprep.mubr.bf16.mxu0 0
        %2079 = vmatmul.mubr.bf16.gmra.mrb[0].mxu0 %v1932
        %v2080 = vpop.f32.mrb[0].mxu0
        %v2081 = vadd.f32 %v1956, %v2080
        %v2082 = vpop.f32.mrb[0].mxu0
        %v2083 = vpop.f32.mrb[0].mxu0
        %v2084 = vadd.f32 %v1956, %v2083
        %v2085 = vpop.f32.mrb[0].mxu0
        %2086 = vmatprep.mubr.bf16.mxu0 0
        %2087 = vmatmul.mubr.bf16.gmra.mrb[0].mxu0 %v1933
        %v2088 = vpop.f32.mrb[0].mxu0
        %v2089 = vadd.f32 %v1956, %v2088
        %v2090 = vpop.f32.mrb[0].mxu0
        %v2091 = vpop.f32.mrb[0].mxu0
        %v2092 = vadd.f32 %v1956, %v2091
        %v2093 = vpop.f32.mrb[0].mxu0
        %2094 = vmatprep.mubr.bf16.mxu0 0
        %2095 = vmatmul.mubr.bf16.gmra.mrb[0].mxu0 %v1934
        %v2096 = vpop.f32.mrb[0].mxu0
        %v2097 = vadd.f32 %v1956, %v2096
        %v2098 = vpop.f32.mrb[0].mxu0
        %v2099 = vpop.f32.mrb[0].mxu0
        %v2100 = vadd.f32 %v1956, %v2099
        %v2101 = vpop.f32.mrb[0].mxu0
        %2102 = vdwg.mxu0
        %v2103 = vmax.f32 %v2041, 0.0
        %v2104 = vmax.f32 %v2044, 0.0
        %v2105 = vmax.f32 %v2049, 0.0
        %v2106 = vmax.f32 %v2052, 0.0
        %v2107 = vmax.f32 %v2057, 0.0
        %v2108 = vmax.f32 %v2060, 0.0
        %v2109 = vmax.f32 %v2065, 0.0
        %v2110 = vmax.f32 %v2068, 0.0
        %v2111 = vmax.f32 %v2073, 0.0
        %v2112 = vmax.f32 %v2076, 0.0
        %v2113 = vmax.f32 %v2081, 0.0
        %v2114 = vmax.f32 %v2084, 0.0
        %v2115 = vmax.f32 %v2089, 0.0
        %v2116 = vmax.f32 %v2092, 0.0
        %v2117 = vmax.f32 %v2097, 0.0
        %v2118 = vmax.f32 %v2100, 0.0
        %v2119 = vpack.c.bf16 %v2104, %v2103
        %v2120 = vpack.c.bf16 %v2106, %v2105
        %v2121 = vpack.c.bf16 %v2108, %v2107
        %v2122 = vpack.c.bf16 %v2110, %v2109
        %v2123 = vpack.c.bf16 %v2112, %v2111
        %v2124 = vpack.c.bf16 %v2114, %v2113
        %v2125 = vpack.c.bf16 %v2116, %v2115
        %v2126 = vpack.c.bf16 %v2118, %v2117
        %v2127 = vld [vmem:[#allocation16] sm:$0xff]
        %v2128 = vld [vmem:[#allocation16 + $0x8] sm:$0xff]
        %v2129 = vld [vmem:[#allocation16 + $0x10] sm:$0xff]
        %v2130 = vld [vmem:[#allocation16 + $0x18] sm:$0xff]
        %v2131 = vld [vmem:[#allocation16 + $0x20] sm:$0xff]
        %v2132 = vld [vmem:[#allocation16 + $0x28] sm:$0xff]
        %v2133 = vld [vmem:[#allocation16 + $0x30] sm:$0xff]
        %v2134 = vld [vmem:[#allocation16 + $0x38] sm:$0xff]
        %v2135 = vld [vmem:[#allocation16 + $0x40] sm:$0xff]
        %v2136 = vld [vmem:[#allocation16 + $0x48] sm:$0xff]
        %v2137 = vld [vmem:[#allocation16 + $0x50] sm:$0xff]
        %v2138 = vld [vmem:[#allocation16 + $0x58] sm:$0xff]
        %v2139 = vld [vmem:[#allocation16 + $0x60] sm:$0xff]
        %v2140 = vld [vmem:[#allocation16 + $0x68] sm:$0xff]
        %v2141 = vld [vmem:[#allocation16 + $0x70] sm:$0xff]
        %v2142 = vld [vmem:[#allocation16 + $0x78] sm:$0xff]
        %v2143 = vld [vmem:[%s16] sm:$0x3]
        %v2145 = vlaneseq
        %v2146 = vshrl.u32 %v2145, 7
        %v2147 = vsub.s32 0, %v2146
        %v2148 = vrot.slane %v2143, %v2147
        %v2149 = vlaneseq
        %v2150 = vshrl.u32 %v2149, 7
        %v2151 = vsub.s32 1, %v2150
        %v2152 = vrot.slane %v2143, %v2151
        %v2171 = vunpack.c.l.b16 %v2127
        %v2172 = vunpack.c.h.b16 %v2127
        %v2173 = vunpack.c.l.b16 %v2128
        %v2174 = vunpack.c.h.b16 %v2128
        %v2175 = vunpack.c.l.b16 %v2129
        %v2176 = vunpack.c.h.b16 %v2129
        %v2177 = vunpack.c.l.b16 %v2130
        %v2178 = vunpack.c.h.b16 %v2130
        %v2179 = vunpack.c.l.b16 %v2131
        %v2180 = vunpack.c.h.b16 %v2131
        %v2181 = vunpack.c.l.b16 %v2132
        %v2182 = vunpack.c.h.b16 %v2132
        %v2183 = vunpack.c.l.b16 %v2133
        %v2184 = vunpack.c.h.b16 %v2133
        %v2185 = vunpack.c.l.b16 %v2134
        %v2186 = vunpack.c.h.b16 %v2134
        %v2187 = vunpack.c.l.b16 %v2135
        %v2188 = vunpack.c.h.b16 %v2135
        %v2189 = vunpack.c.l.b16 %v2136
        %v2190 = vunpack.c.h.b16 %v2136
        %v2191 = vunpack.c.l.b16 %v2137
        %v2192 = vunpack.c.h.b16 %v2137
        %v2193 = vunpack.c.l.b16 %v2138
        %v2194 = vunpack.c.h.b16 %v2138
        %v2195 = vunpack.c.l.b16 %v2139
        %v2196 = vunpack.c.h.b16 %v2139
        %v2197 = vunpack.c.l.b16 %v2140
        %v2198 = vunpack.c.h.b16 %v2140
        %v2199 = vunpack.c.l.b16 %v2141
        %v2200 = vunpack.c.h.b16 %v2141
        %v2201 = vunpack.c.l.b16 %v2142
        %v2202 = vunpack.c.h.b16 %v2142
        %v2203 = vpack.c.b16 %v2173, %v2171
        %v2204 = vpack.c.b16 %v2174, %v2172
        %v2205 = vpack.c.b16 %v2177, %v2175
        %v2206 = vpack.c.b16 %v2178, %v2176
        %v2207 = vpack.c.b16 %v2181, %v2179
        %v2208 = vpack.c.b16 %v2182, %v2180
        %v2209 = vpack.c.b16 %v2185, %v2183
        %v2210 = vpack.c.b16 %v2186, %v2184
        %v2211 = vpack.c.b16 %v2189, %v2187
        %v2212 = vpack.c.b16 %v2190, %v2188
        %v2213 = vpack.c.b16 %v2193, %v2191
        %v2214 = vpack.c.b16 %v2194, %v2192
        %v2215 = vpack.c.b16 %v2197, %v2195
        %v2216 = vpack.c.b16 %v2198, %v2196
        %v2217 = vpack.c.b16 %v2201, %v2199
        %v2218 = vpack.c.b16 %v2202, %v2200
        %2235 = vmatprep.subr.bf16.mxu0 %v2204
        %2236 = vmatpush1.bf16.msra.mxu0 %v2203
        %2237 = vmatprep.subr.bf16.mxu0 %v2206
        %2238 = vmatpush1.bf16.msra.mxu0 %v2205
        %2239 = vmatprep.subr.bf16.mxu0 %v2208
        %2240 = vmatpush1.bf16.msra.mxu0 %v2207
        %2241 = vmatprep.subr.bf16.mxu0 %v2210
        %2242 = vmatpush1.bf16.msra.mxu0 %v2209
        %2243 = vmatprep.subr.bf16.mxu0 %v2212
        %2244 = vmatpush1.bf16.msra.mxu0 %v2211
        %2245 = vmatprep.subr.bf16.mxu0 %v2214
        %2246 = vmatpush1.bf16.msra.mxu0 %v2213
        %2247 = vmatprep.subr.bf16.mxu0 %v2216
        %2248 = vmatpush1.bf16.msra.mxu0 %v2215
        %2249 = vmatprep.subr.bf16.mxu0 %v2218
        %2250 = vmatpush1.bf16.msra.mxu0 %v2217
        %2251 = vmatprep.subr.bf16.mxu0 0
        %2252 = vmatpush1.bf16.msra.mxu0 0
        %2253 = vmatprep.subr.bf16.mxu0 0
        %2254 = vmatpush1.bf16.msra.mxu0 0
        %2255 = vmatprep.subr.bf16.mxu0 0
        %2256 = vmatpush1.bf16.msra.mxu0 0
        %2257 = vmatprep.subr.bf16.mxu0 0
        %2258 = vmatpush1.bf16.msra.mxu0 0
        %2259 = vmatprep.subr.bf16.mxu0 0
        %2260 = vmatpush1.bf16.msra.mxu0 0
        %2261 = vmatprep.subr.bf16.mxu0 0
        %2262 = vmatpush1.bf16.msra.mxu0 0
        %2263 = vmatprep.subr.bf16.mxu0 0
        %2264 = vmatpush1.bf16.msra.mxu0 0
        %2265 = vmatprep.subr.bf16.mxu0 0
        %2266 = vmatpush1.bf16.msra.mxu0 0
        %2267 = vmatprep.mubr.bf16.mxu0 0
        %2268 = vmatmul.mubr.bf16.gmra.mrb[0].mxu0 %v2119
        %v2269 = vpop.f32.mrb[0].mxu0
        %v2270 = vadd.f32 %v2148, %v2269
        %v2271 = vpop.f32.mrb[0].mxu0
        %v2272 = vadd.f32 %v2152, %v2271
        %v2273 = vpop.f32.mrb[0].mxu0
        %v2274 = vadd.f32 %v2148, %v2273
        %v2275 = vpop.f32.mrb[0].mxu0
        %v2276 = vadd.f32 %v2152, %v2275
        %2277 = vmatprep.mubr.bf16.mxu0 0
        %2278 = vmatmul.mubr.bf16.gmra.mrb[0].mxu0 %v2120
        %v2279 = vpop.f32.mrb[0].mxu0
        %v2280 = vadd.f32 %v2148, %v2279
        %v2281 = vpop.f32.mrb[0].mxu0
        %v2282 = vadd.f32 %v2152, %v2281
        %v2283 = vpop.f32.mrb[0].mxu0
        %v2284 = vadd.f32 %v2148, %v2283
        %v2285 = vpop.f32.mrb[0].mxu0
        %v2286 = vadd.f32 %v2152, %v2285
        %2287 = vmatprep.mubr.bf16.mxu0 0
        %2288 = vmatmul.mubr.bf16.gmra.mrb[0].mxu0 %v2121
        %v2289 = vpop.f32.mrb[0].mxu0
        %v2290 = vadd.f32 %v2148, %v2289
        %v2291 = vpop.f32.mrb[0].mxu0
        %v2292 = vadd.f32 %v2152, %v2291
        %v2293 = vpop.f32.mrb[0].mxu0
        %v2294 = vadd.f32 %v2148, %v2293
        %v2295 = vpop.f32.mrb[0].mxu0
        %v2296 = vadd.f32 %v2152, %v2295
        %2297 = vmatprep.mubr.bf16.mxu0 0
        %2298 = vmatmul.mubr.bf16.gmra.mrb[0].mxu0 %v2122
        %v2299 = vpop.f32.mrb[0].mxu0
        %v2300 = vadd.f32 %v2148, %v2299
        %v2301 = vpop.f32.mrb[0].mxu0
        %v2302 = vadd.f32 %v2152, %v2301
        %v2303 = vpop.f32.mrb[0].mxu0
        %v2304 = vadd.f32 %v2148, %v2303
        %v2305 = vpop.f32.mrb[0].mxu0
        %v2306 = vadd.f32 %v2152, %v2305
        %2307 = vmatprep.mubr.bf16.mxu0 0
        %2308 = vmatmul.mubr.bf16.gmra.mrb[0].mxu0 %v2123
        %v2309 = vpop.f32.mrb[0].mxu0
        %v2310 = vadd.f32 %v2148, %v2309
        %v2311 = vpop.f32.mrb[0].mxu0
        %v2312 = vadd.f32 %v2152, %v2311
        %v2313 = vpop.f32.mrb[0].mxu0
        %v2314 = vadd.f32 %v2148, %v2313
        %v2315 = vpop.f32.mrb[0].mxu0
        %v2316 = vadd.f32 %v2152, %v2315
        %2317 = vmatprep.mubr.bf16.mxu0 0
        %2318 = vmatmul.mubr.bf16.gmra.mrb[0].mxu0 %v2124
        %v2319 = vpop.f32.mrb[0].mxu0
        %v2320 = vadd.f32 %v2148, %v2319
        %v2321 = vpop.f32.mrb[0].mxu0
        %v2322 = vadd.f32 %v2152, %v2321
        %v2323 = vpop.f32.mrb[0].mxu0
        %v2324 = vadd.f32 %v2148, %v2323
        %v2325 = vpop.f32.mrb[0].mxu0
        %v2326 = vadd.f32 %v2152, %v2325
        %2327 = vmatprep.mubr.bf16.mxu0 0
        %2328 = vmatmul.mubr.bf16.gmra.mrb[0].mxu0 %v2125
        %v2329 = vpop.f32.mrb[0].mxu0
        %v2330 = vadd.f32 %v2148, %v2329
        %v2331 = vpop.f32.mrb[0].mxu0
        %v2332 = vadd.f32 %v2152, %v2331
        %v2333 = vpop.f32.mrb[0].mxu0
        %v2334 = vadd.f32 %v2148, %v2333
        %v2335 = vpop.f32.mrb[0].mxu0
        %v2336 = vadd.f32 %v2152, %v2335
        %2337 = vmatprep.mubr.bf16.mxu0 0
        %2338 = vmatmul.mubr.bf16.gmra.mrb[0].mxu0 %v2126
        %v2339 = vpop.f32.mrb[0].mxu0
        %v2340 = vadd.f32 %v2148, %v2339
        %v2341 = vpop.f32.mrb[0].mxu0
        %v2342 = vadd.f32 %v2152, %v2341
        %v2343 = vpop.f32.mrb[0].mxu0
        %v2344 = vadd.f32 %v2148, %v2343
        %v2345 = vpop.f32.mrb[0].mxu0
        %v2346 = vadd.f32 %v2152, %v2345
        %2347 = vdwg.mxu0
        %2348 = vst [vmem:[%s683] sm:$0xff] %v2270
        %2349 = vst [vmem:[%s683 + $0x8] sm:$0xff] %v2272
        %2350 = vst [vmem:[%s683 + $0x10] sm:$0xff] %v2274
        %2351 = vst [vmem:[%s683 + $0x18] sm:$0xff] %v2276
        %2352 = vst [vmem:[%s683 + $0x20] sm:$0xff] %v2280
        %2353 = vst [vmem:[%s683 + $0x28] sm:$0xff] %v2282
        %2354 = vst [vmem:[%s683 + $0x30] sm:$0xff] %v2284
        %2355 = vst [vmem:[%s683 + $0x38] sm:$0xff] %v2286
        %2356 = vst [vmem:[%s683 + $0x40] sm:$0xff] %v2290
        %2357 = vst [vmem:[%s683 + $0x48] sm:$0xff] %v2292
        %2358 = vst [vmem:[%s683 + $0x50] sm:$0xff] %v2294
        %2359 = vst [vmem:[%s683 + $0x58] sm:$0xff] %v2296
        %2360 = vst [vmem:[%s683 + $0x60] sm:$0xff] %v2300
        %2361 = vst [vmem:[%s683 + $0x68] sm:$0xff] %v2302
        %2362 = vst [vmem:[%s683 + $0x70] sm:$0xff] %v2304
        %2363 = vst [vmem:[%s683 + $0x78] sm:$0xff] %v2306
        %2364 = vst [vmem:[%s683 + $0x80] sm:$0xff] %v2310
        %2365 = vst [vmem:[%s683 + $0x88] sm:$0xff] %v2312
        %2366 = vst [vmem:[%s683 + $0x90] sm:$0xff] %v2314
        %2367 = vst [vmem:[%s683 + $0x98] sm:$0xff] %v2316
        %2368 = vst [vmem:[%s683 + $0xa0] sm:$0xff] %v2320
        %2369 = vst [vmem:[%s683 + $0xa8] sm:$0xff] %v2322
        %2370 = vst [vmem:[%s683 + $0xb0] sm:$0xff] %v2324
        %2371 = vst [vmem:[%s683 + $0xb8] sm:$0xff] %v2326
        %2372 = vst [vmem:[%s683 + $0xc0] sm:$0xff] %v2330
        %2373 = vst [vmem:[%s683 + $0xc8] sm:$0xff] %v2332
        %2374 = vst [vmem:[%s683 + $0xd0] sm:$0xff] %v2334
        %2375 = vst [vmem:[%s683 + $0xd8] sm:$0xff] %v2336
        %2376 = vst [vmem:[%s683 + $0xe0] sm:$0xff] %v2340
        %2377 = vst [vmem:[%s683 + $0xe8] sm:$0xff] %v2342
        %2378 = vst [vmem:[%s683 + $0xf0] sm:$0xff] %v2344
        %2379 = vst [vmem:[%s683 + $0xf8] sm:$0xff] %v2346
        %s2380 = sand.u32 %s408, 1
        %s2381 = scalar_lea.sflag [#allocation4], %s2380
        %s2382 = sand.u32 %s408, 1
        %s2383 = smul.addr %s2382, 256
        %s2384 = scalar_lea.vmem [#allocation17], %s2383
        // Predicated region
        $region125: #{linear_autoencoder.1} parent=87 // pred_check
          %p2385 = pneg %p418
        $region126: #{linear_autoencoder.1} parent=87 // pred_check_branch
          %2387 = sbr.rel (%p2385) target = $region128
        $region127: #{linear_autoencoder.1} parent=87 // pred_region
          %s2388 = smul.u32 16, %s38
          %s2390 = ssub.s32 4096, 4096
          %2391 = vsyncadd %s2381, %s2390
          %s2392 = smul.addr %s2388, 2
          %s2393 = smul.addr %s2392, 128
          %s2394 = scalar_lea.hbm %s17, %s2393
          %s2395 = sshll.u32 %s2384, 4
          %s2396 = int_to_ptr.vmem [resolvable:$true] %s2395
          %2401 = dma.vmem_to_hbm [thread:$0]  %s2396, 4096, %s2394, %s2381, 256, 256, 16
        $region128: #{linear_autoencoder.1} parent=87 // pred_fallthru
          _
      $region88: #{linear_autoencoder.1} parent=5 // pred_fallthru
        _
      %p2402 = scmp.le.s32.totalorder 2, %s33
      // Predicated region
      $region129: #{linear_autoencoder.1} parent=5 // pred_check
        %p2403 = pneg %p2402
      $region130: #{linear_autoencoder.1} parent=5 // pred_check_branch
        %2405 = sbr.rel (%p2403) target = $region132
      $region131: #{linear_autoencoder.1} parent=5 // pred_region
        %s2406 = ssub.s32 %s33, 2
        // Predicated region
        $region133: #{linear_autoencoder.1} parent=131 // pred_check
          %p2407 = pneg %p424
        $region134: #{linear_autoencoder.1} parent=131 // pred_check_branch
          %2409 = sbr.rel (%p2407) target = $region136
        $region135: #{linear_autoencoder.1} parent=131 // pred_region
          %s2410 = sand.u32 %s409, 1
          %s2411 = scalar_lea.sflag [#allocation4], %s2410
          %s2412 = sand.u32 %s409, 1
          %s2413 = smul.addr %s2412, 256
          %s2414 = scalar_lea.vmem [#allocation17], %s2413
          %2415 = dma.done %s2411, 4096
        $region136: #{linear_autoencoder.1} parent=131 // pred_fallthru
          _
      $region132: #{linear_autoencoder.1} parent=5 // pred_fallthru
        _
    $region6: #{linear_autoencoder.1} parent=1 // loop_footer
      %s37 = sadd.s32 1, %s33
    $region7: #{linear_autoencoder.1} parent=1 // loop_footer_branch
      %32 = sbr.rel target = $region3
    $region8: #{linear_autoencoder.1} parent=1 // loop_exit
      _
    %2416 = vsyncpa [#allocation3], 1
    %s2417 = scalar_lea.sflag [#allocation3], 1
    %2418 = vsyncpa %s2417, 1
    %2419 = vsyncpa [#allocation6], 1
    %2420 = vsyncpa [#allocation9], 1
    %2421 = vsyncpa [#allocation12], 1
    %2422 = vsyncpa [#allocation15], 1
    %2423 = vsyncpa [#allocation4], 1
    %s2424 = scalar_lea.sflag [#allocation4], 1
    %2425 = vsyncpa %s2424, 1

</llo_original>
